<compile_context>
chip_gen: v6e
topology: v6e:2x2x1
jax: 0.10.0
libtpu: 0.0.40
codegen_flags: <defaults>
</compile_context>

<pallas_src>
import functools

import jax
import jax.numpy as jnp
import numpy as np
from jax import lax
from jax.experimental import pallas as pl
from jax.experimental.pallas import tpu as pltpu

LN_EPS = 1e-5  # PyTorch LayerNorm default


def _layernorm(v, g, b):
    mu = jnp.mean(v, axis=-1, keepdims=True)
    var = jnp.mean((v - mu) ** 2, axis=-1, keepdims=True)
    return (v - mu) * lax.rsqrt(var + LN_EPS) * g + b


# ----------------------------------------------------------------------------
# Fused forward kernel: grid = (batch, layer); h carried in VMEM scratch.
# ----------------------------------------------------------------------------
def fused_forward_kernel(src_ref, proj_w_ref, gw_ref, cls_w_ref, cls_b_ref,
                         wqkv_ref, wo_ref, w1_ref, w2_ref,
                         lnb_ref, bqkv_ref, b1_ref,
                         o_ref, h_ref, *, num_heads):
    # src_ref : (S, F)      f32   (per-batch block)
    # proj_w  : (F, D)      bf16
    # gw      : (3, D)      f32   rows = [proj_b, norm_w, norm_b]
    # cls_w   : (D, C)      bf16
    # cls_b   : (1, C)      f32
    # wqkv    : (D, 3D)     bf16  (per-layer block; Q columns pre-scaled)
    # wo      : (D, D)      bf16
    # w1      : (D, 4D)     bf16
    # w2      : (4D, D)     bf16
    # lnb     : (6, D)      f32   rows = [ln1w, ln1b, ln2w, ln2b, bo, b2]
    # bqkv    : (1, 3D)     f32   (Q part pre-scaled)
    # b1      : (1, 4D)     f32
    # o_ref   : (1, C)      f32   (per-batch block, written on last layer)
    # h_ref   : (S, D)      f32   VMEM scratch carry across layer grid steps
    l = pl.program_id(1)
    num_layers = pl.num_programs(1)
    S, D = h_ref.shape
    Dh = D // num_heads

    # ---- first layer step for this batch: input projection Linear(2, D) ----
    @pl.when(l == 0)
    def _():
        x = src_ref[...].astype(jnp.bfloat16)                       # (S, F)
        h_ref[...] = (jnp.dot(x, proj_w_ref[...],
                              preferred_element_type=jnp.float32)
                      + gw_ref[0])

    h = h_ref[...]                                                  # (S, D) f32

    ln1w, ln1b = lnb_ref[0], lnb_ref[1]
    ln2w, ln2b = lnb_ref[2], lnb_ref[3]
    bo, b2 = lnb_ref[4], lnb_ref[5]

    # ---- self-attention block (pre-LN); 1/sqrt(Dh) folded into Q weights ----
    h1 = _layernorm(h, ln1w, ln1b)
    qkv = (jnp.dot(h1.astype(jnp.bfloat16), wqkv_ref[...],
                   preferred_element_type=jnp.float32)
           + bqkv_ref[...])                                          # (S, 3D)

    heads = []
    for hd in range(num_heads):                                      # static unroll
        q = qkv[:, hd * Dh:(hd + 1) * Dh].astype(jnp.bfloat16)
        k = qkv[:, D + hd * Dh:D + (hd + 1) * Dh].astype(jnp.bfloat16)
        v = qkv[:, 2 * D + hd * Dh:2 * D + (hd + 1) * Dh].astype(jnp.bfloat16)
        s = lax.dot_general(q, k, (((1,), (1,)), ((), ())),
                            preferred_element_type=jnp.float32)      # (S, S) f32
        s = s - jnp.max(s, axis=-1, keepdims=True)
        p = jnp.exp(s)
        den = jnp.sum(p, axis=-1, keepdims=True)
        r = pl.reciprocal(den, approx=True)
        r = r * (2.0 - den * r)                                      # Newton step
        p = p * r
        heads.append(jnp.dot(p.astype(jnp.bfloat16), v,
                             preferred_element_type=jnp.float32))    # (S, Dh)
    ctx = jnp.concatenate(heads, axis=-1)                            # (S, D)
    attn = (jnp.dot(ctx.astype(jnp.bfloat16), wo_ref[...],
                    preferred_element_type=jnp.float32) + bo)

    x2 = h + attn                                                    # inner residual

    # ---- feed-forward block (pre-LN) ----
    h2 = _layernorm(x2, ln2w, ln2b)
    ff = (jnp.dot(h2.astype(jnp.bfloat16), w1_ref[...],
                  preferred_element_type=jnp.float32) + b1_ref[...])
    ff = jnp.maximum(ff, 0.0)                                        # relu
    ff = (jnp.dot(ff.astype(jnp.bfloat16), w2_ref[...],
                  preferred_element_type=jnp.float32) + b2)

    # ---- outer residual + shared self.norm : h = LN(2h + attn + ff) ----
    h_new = _layernorm(x2 + ff + h, gw_ref[1], gw_ref[2])
    h_ref[...] = h_new

    # ---- last layer: mean-pool (as MXU matmul) + classifier; dropout = id ----
    @pl.when(l == num_layers - 1)
    def _():
        pool = jnp.full((1, S), 1.0 / S, dtype=jnp.bfloat16)
        m = jnp.dot(pool, h_new.astype(jnp.bfloat16),
                    preferred_element_type=jnp.float32)              # (1, D)
        logits = (jnp.dot(m.astype(jnp.bfloat16), cls_w_ref[...],
                          preferred_element_type=jnp.float32)
                  + cls_b_ref[...])
        o_ref[...] = logits.astype(o_ref.dtype)


# ----------------------------------------------------------------------------
# Host-side parameter packing (row-aligned slabs, bf16 MXU operands, Q prescale)
# ----------------------------------------------------------------------------
def pack_params(p, num_heads):
    D = p["proj_w"].shape[1]
    Dh = D // num_heads
    scale = 1.0 / float(np.sqrt(Dh))

    gw = jnp.concatenate([p["proj_b"].reshape(1, D),
                          p["norm_w"].reshape(1, D),
                          p["norm_b"].reshape(1, D)], axis=0)          # (3, D)

    wqkv, wo, w1, w2, lnb, bqkv, b1 = [], [], [], [], [], [], []
    for lp in p["layers"]:
        wq = lp["wqkv"].at[:, :D].multiply(scale)          # fold 1/sqrt(Dh) into Q
        bq = lp["bqkv"].at[:, :D].multiply(scale)
        wqkv.append(wq.astype(jnp.bfloat16))
        wo.append(lp["wo"].astype(jnp.bfloat16))
        w1.append(lp["w1"].astype(jnp.bfloat16))
        w2.append(lp["w2"].astype(jnp.bfloat16))
        lnb.append(jnp.stack([lp["ln1w"].reshape(D), lp["ln1b"].reshape(D),
                              lp["ln2w"].reshape(D), lp["ln2b"].reshape(D),
                              lp["bo"].reshape(D), lp["b2"].reshape(D)], axis=0))
        bqkv.append(bq.reshape(1, 3 * D))
        b1.append(lp["b1"].reshape(1, 4 * D))

    return dict(
        proj_w=p["proj_w"].astype(jnp.bfloat16),
        gw=gw,
        cls_w=p["cls_w"].astype(jnp.bfloat16),
        cls_b=p["cls_b"].reshape(1, -1),
        wqkv=jnp.stack(wqkv), wo=jnp.stack(wo),
        w1=jnp.stack(w1), w2=jnp.stack(w2),
        lnb=jnp.stack(lnb), bqkv=jnp.stack(bqkv), b1=jnp.stack(b1),
    )


# ----------------------------------------------------------------------------
# Wrapper: grid = (B, L), batch "parallel" (v7x 2-TC), layer "arbitrary" carry.
# ----------------------------------------------------------------------------
def ecgformer_forward(src, params, *, num_heads):
    B, S, F = src.shape
    D = params["proj_w"].shape[1]
    C = params["cls_w"].shape[1]
    L = len(params["layers"])
    pk = pack_params(params, num_heads)

    def glob(shape):
        return pl.BlockSpec(shape, lambda b, l, _n=len(shape): (0,) * _n)

    in_specs = [
        pl.BlockSpec((None, S, F), lambda b, l: (b, 0, 0)),          # src (per batch)
        glob((F, D)),                                                # proj_w
        glob((3, D)),                                                # gw
        glob((D, C)),                                                # cls_w
        glob((1, C)),                                                # cls_b
        pl.BlockSpec((None, D, 3 * D), lambda b, l: (l, 0, 0)),      # wqkv (per layer)
        pl.BlockSpec((None, D, D), lambda b, l: (l, 0, 0)),          # wo
        pl.BlockSpec((None, D, 4 * D), lambda b, l: (l, 0, 0)),      # w1
        pl.BlockSpec((None, 4 * D, D), lambda b, l: (l, 0, 0)),      # w2
        pl.BlockSpec((None, 6, D), lambda b, l: (l, 0, 0)),          # lnb
        pl.BlockSpec((None, 1, 3 * D), lambda b, l: (l, 0, 0)),      # bqkv
        pl.BlockSpec((None, 1, 4 * D), lambda b, l: (l, 0, 0)),      # b1
    ]
    out_spec = pl.BlockSpec((None, 1, C), lambda b, l: (b, 0, 0))    # revisit across l

    # Scoped-VMEM sizing from the actual slab footprint (double-buffered layer
    # slabs + resident globals + activation scratch), with generous headroom.
    def nbytes(a):
        return int(np.prod(a.shape)) * a.dtype.itemsize
    per_layer = sum(nbytes(pk[k]) // L
                    for k in ("wqkv", "wo", "w1", "w2", "lnb", "bqkv", "b1"))
    resident = (2 * per_layer
                + sum(nbytes(pk[k]) for k in ("proj_w", "gw", "cls_w", "cls_b"))
                + 2 * (S * F * 4)          # double-buffered src tile
                + S * D * 4                # h carry scratch
                + 2 * C * 4)               # output block
    vmem_limit = int(min(100 << 20, max(16 << 20, 4 * resident)))

    out = pl.pallas_call(
        functools.partial(fused_forward_kernel, num_heads=num_heads),
        out_shape=jax.ShapeDtypeStruct((B, 1, C), jnp.float32),
        grid_spec=pltpu.PrefetchScalarGridSpec(
            num_scalar_prefetch=0,
            grid=(B, L),
            in_specs=in_specs,
            out_specs=out_spec,
            scratch_shapes=[pltpu.VMEM((S, D), jnp.float32)],
        ),
        compiler_params=pltpu.CompilerParams(
            dimension_semantics=("parallel", "arbitrary"),
            vmem_limit_bytes=vmem_limit,
        ),
    )(src, pk["proj_w"], pk["gw"], pk["cls_w"], pk["cls_b"],
      pk["wqkv"], pk["wo"], pk["w1"], pk["w2"],
      pk["lnb"], pk["bqkv"], pk["b1"])
    return out.reshape(B, C)


# ----------------------------------------------------------------------------
# Deterministic parameter construction (weights stored as (in, out))
# ----------------------------------------------------------------------------
def make_params(key, model_dim, num_heads, num_layers, num_classes, in_features=2):
    D = model_dim
    keys = iter(jax.random.split(key, 64))

    def w(shape, scale=0.05):
        return (scale * jax.random.normal(next(keys), shape)).astype(jnp.float32)

    params = {
        "proj_w": w((in_features, D)),
        "proj_b": w((1, D), 0.01),
        "norm_w": jnp.ones((1, D), jnp.float32),
        "norm_b": jnp.zeros((1, D), jnp.float32),
        "cls_w": w((D, num_classes)),
        "cls_b": jnp.zeros((1, num_classes), jnp.float32),
        "layers": [],
    }
    for _ in range(num_layers):
        params["layers"].append({
            "ln1w": jnp.ones((1, D), jnp.float32),
            "ln1b": jnp.zeros((1, D), jnp.float32),
            "wqkv": w((D, 3 * D)),
            "bqkv": w((1, 3 * D), 0.01),
            "wo":   w((D, D)),
            "bo":   w((1, D), 0.01),
            "ln2w": jnp.ones((1, D), jnp.float32),
            "ln2b": jnp.zeros((1, D), jnp.float32),
            "w1":   w((D, 4 * D)),
            "b1":   w((1, 4 * D), 0.01),
            "w2":   w((4 * D, D)),
            "b2":   w((1, D), 0.01),
        })
    return params


# ----------------------------------------------------------------------------
# Pure-JAX f32 reference (same math, no Pallas) for correctness checking
# ----------------------------------------------------------------------------
def ref_forward(src, p, *, num_heads):
    def ln(v, g, b):
        mu = v.mean(-1, keepdims=True)
        var = ((v - mu) ** 2).mean(-1, keepdims=True)
        return (v - mu) / jnp.sqrt(var + LN_EPS) * g + b

    h = src @ p["proj_w"] + p["proj_b"]
    B, S, D = h.shape
    Dh = D // num_heads
    for lp in p["layers"]:
        x = h
        h1 = ln(x, lp["ln1w"], lp["ln1b"])
        qkv = h1 @ lp["wqkv"] + lp["bqkv"]
        q, k, v = qkv[..., :D], qkv[..., D:2 * D], qkv[..., 2 * D:]
        qh = q.reshape(B, S, num_heads, Dh).transpose(0, 2, 1, 3)
        kh = k.reshape(B, S, num_heads, Dh).transpose(0, 2, 1, 3)
        vh = v.reshape(B, S, num_heads, Dh).transpose(0, 2, 1, 3)
        s = jnp.einsum("bhqd,bhkd->bhqk", qh, kh) / jnp.sqrt(Dh)
        pm = jax.nn.softmax(s, axis=-1)
        o = jnp.einsum("bhqk,bhkd->bhqd", pm, vh).transpose(0, 2, 1, 3).reshape(B, S, D)
        attn = o @ lp["wo"] + lp["bo"]
        x2 = x + attn
        h2 = ln(x2, lp["ln2w"], lp["ln2b"])
        ff = jax.nn.relu(h2 @ lp["w1"] + lp["b1"]) @ lp["w2"] + lp["b2"]
        h = ln(x2 + ff + x, p["norm_w"], p["norm_b"])
    return h.mean(axis=1) @ p["cls_w"] + p["cls_b"]


# ----------------------------------------------------------------------------
if __name__ == "__main__":
    B, S, F = 2, 16, 2            # (batch, seq, input features=2 for Linear(2, D))
    D, H, L, C = 32, 4, 2, 2      # model_dim, num_heads, num_encoder_layers, classes

    key = jax.random.PRNGKey(0)
    k_in, k_par = jax.random.split(key)
    src = jax.random.normal(k_in, (B, S, F), dtype=jnp.float32)
    params = make_params(k_par, D, H, L, C, in_features=F)

    out = ecgformer_forward(src, params, num_heads=H)
    out = jax.block_until_ready(out)

    expected = ref_forward(src, params, num_heads=H)
    # Tolerance accounts for bf16 MXU operands (f32 accumulation); softmax,
    # LayerNorm and residual math stay f32, and the approx reciprocal gets one
    # Newton refinement step.
    np.testing.assert_allclose(np.asarray(out), np.asarray(expected),
                               rtol=2e-2, atol=2e-2)
    print("KERNEL_OK")
</pallas_src>

<mosaic_0001>
module attributes {stable_mosaic.version = 11 : i64} {
  func.func @fused_forward_kernel(%arg0: i32, %arg1: i32, %arg2: memref<1x16x2xf32, #tpu.memory_space<vmem>>, %arg3: memref<2x32xbf16, #tpu.memory_space<vmem>>, %arg4: memref<3x32xf32, #tpu.memory_space<vmem>>, %arg5: memref<32x2xbf16, #tpu.memory_space<vmem>>, %arg6: memref<1x2xf32, #tpu.memory_space<vmem>>, %arg7: memref<1x32x96xbf16, #tpu.memory_space<vmem>>, %arg8: memref<1x32x32xbf16, #tpu.memory_space<vmem>>, %arg9: memref<1x32x128xbf16, #tpu.memory_space<vmem>>, %arg10: memref<1x128x32xbf16, #tpu.memory_space<vmem>>, %arg11: memref<1x6x32xf32, #tpu.memory_space<vmem>>, %arg12: memref<1x1x96xf32, #tpu.memory_space<vmem>>, %arg13: memref<1x1x128xf32, #tpu.memory_space<vmem>>, %arg14: memref<1x1x2xf32, #tpu.memory_space<vmem>>, %arg15: memref<16x32xf32, #tpu.memory_space<vmem>>) attributes {dimension_semantics = [#tpu.dimension_semantics<parallel>, #tpu.dimension_semantics<arbitrary>], iteration_bounds = array<i64: 2, 2>, scalar_prefetch = 0 : i64, scratch_operands = 1 : i64, tpu.core_type = #tpu.core_type<tc>, window_params = [{transform_indices = @transform_0, window_bounds = array<i64: 1, 16, 2>}, {pipeline_mode = #tpu.pipeline_mode<synchronous>, transform_indices = @transform_1, window_bounds = array<i64: 2, 32>}, {pipeline_mode = #tpu.pipeline_mode<synchronous>, transform_indices = @transform_2, window_bounds = array<i64: 3, 32>}, {pipeline_mode = #tpu.pipeline_mode<synchronous>, transform_indices = @transform_3, window_bounds = array<i64: 32, 2>}, {pipeline_mode = #tpu.pipeline_mode<synchronous>, transform_indices = @transform_4, window_bounds = array<i64: 1, 2>}, {transform_indices = @transform_5, window_bounds = array<i64: 1, 32, 96>}, {transform_indices = @transform_6, window_bounds = array<i64: 1, 32, 32>}, {transform_indices = @transform_7, window_bounds = array<i64: 1, 32, 128>}, {transform_indices = @transform_8, window_bounds = array<i64: 1, 128, 32>}, {transform_indices = @transform_9, window_bounds = array<i64: 1, 6, 32>}, {transform_indices = @transform_10, window_bounds = array<i64: 1, 1, 96>}, {transform_indices = @transform_11, window_bounds = array<i64: 1, 1, 128>}, {transform_indices = @transform_12, window_bounds = array<i64: 1, 1, 2>}]} {
    %c0_i32 = arith.constant 0 : i32
    %0 = arith.cmpi eq, %arg1, %c0_i32 : i32
    %1 = arith.extui %0 : i1 to i32
    %c0_i32_0 = arith.constant 0 : i32
    %2 = arith.cmpi ne, %1, %c0_i32_0 : i32
    scf.if %2 {
      %c0_79 = arith.constant 0 : index
      %c0_80 = arith.constant 0 : index
      %c0_81 = arith.constant 0 : index
      %224 = vector.load %arg2[%c0_79, %c0_80, %c0_81] : memref<1x16x2xf32, #tpu.memory_space<vmem>>, vector<1x16x2xf32>
      %225 = vector.shape_cast %224 : vector<1x16x2xf32> to vector<16x2xf32>
      %226 = arith.truncf %225 : vector<16x2xf32> to vector<16x2xbf16>
      %c0_82 = arith.constant 0 : index
      %c0_83 = arith.constant 0 : index
      %227 = vector.load %arg3[%c0_82, %c0_83] : memref<2x32xbf16, #tpu.memory_space<vmem>>, vector<2x32xbf16>
      %cst_84 = arith.constant dense<0.000000e+00> : vector<16x32xf32>
      %228 = tpu.matmul %226, %227, %cst_84 {dimension_numbers = #tpu.dot_dimension_numbers<[1], [0], [0], [1], [0, 0, 1, 1], [], []>} : vector<16x2xbf16>, vector<2x32xbf16>, vector<16x32xf32> -> vector<16x32xf32>
      %c0_85 = arith.constant 0 : index
      %c0_86 = arith.constant 0 : index
      %229 = vector.load %arg4[%c0_85, %c0_86] : memref<3x32xf32, #tpu.memory_space<vmem>>, vector<1x32xf32>
      %230 = vector.shape_cast %229 : vector<1x32xf32> to vector<32xf32>
      %231 = vector.shape_cast %230 : vector<32xf32> to vector<1x32xf32>
      %232 = vector.broadcast %231 : vector<1x32xf32> to vector<16x32xf32>
      %233 = arith.addf %228, %232 : vector<16x32xf32>
      %c0_87 = arith.constant 0 : index
      %c0_88 = arith.constant 0 : index
      %234 = vector.load %arg15[%c0_87, %c0_88] : memref<16x32xf32, #tpu.memory_space<vmem>>, vector<16x32xf32>
      tpu.vector_store %arg15[%c0_87, %c0_88], %233 {strides = array<i32>} : memref<16x32xf32, #tpu.memory_space<vmem>>, vector<16x32xf32>,
    } else {
    }
    %c0 = arith.constant 0 : index
    %c0_1 = arith.constant 0 : index
    %3 = vector.load %arg15[%c0, %c0_1] : memref<16x32xf32, #tpu.memory_space<vmem>>, vector<16x32xf32>
    %c0_2 = arith.constant 0 : index
    %c0_3 = arith.constant 0 : index
    %c0_4 = arith.constant 0 : index
    %4 = vector.load %arg11[%c0_2, %c0_3, %c0_4] : memref<1x6x32xf32, #tpu.memory_space<vmem>>, vector<1x1x32xf32>
    %5 = vector.shape_cast %4 : vector<1x1x32xf32> to vector<32xf32>
    %c0_5 = arith.constant 0 : index
    %c1 = arith.constant 1 : index
    %c0_6 = arith.constant 0 : index
    %6 = vector.load %arg11[%c0_5, %c1, %c0_6] : memref<1x6x32xf32, #tpu.memory_space<vmem>>, vector<1x1x32xf32>
    %7 = vector.shape_cast %6 : vector<1x1x32xf32> to vector<32xf32>
    %c0_7 = arith.constant 0 : index
    %c2 = arith.constant 2 : index
    %c0_8 = arith.constant 0 : index
    %8 = vector.load %arg11[%c0_7, %c2, %c0_8] : memref<1x6x32xf32, #tpu.memory_space<vmem>>, vector<1x1x32xf32>
    %9 = vector.shape_cast %8 : vector<1x1x32xf32> to vector<32xf32>
    %c0_9 = arith.constant 0 : index
    %c3 = arith.constant 3 : index
    %c0_10 = arith.constant 0 : index
    %10 = vector.load %arg11[%c0_9, %c3, %c0_10] : memref<1x6x32xf32, #tpu.memory_space<vmem>>, vector<1x1x32xf32>
    %11 = vector.shape_cast %10 : vector<1x1x32xf32> to vector<32xf32>
    %c0_11 = arith.constant 0 : index
    %c4 = arith.constant 4 : index
    %c0_12 = arith.constant 0 : index
    %12 = vector.load %arg11[%c0_11, %c4, %c0_12] : memref<1x6x32xf32, #tpu.memory_space<vmem>>, vector<1x1x32xf32>
    %13 = vector.shape_cast %12 : vector<1x1x32xf32> to vector<32xf32>
    %c0_13 = arith.constant 0 : index
    %c5 = arith.constant 5 : index
    %c0_14 = arith.constant 0 : index
    %14 = vector.load %arg11[%c0_13, %c5, %c0_14] : memref<1x6x32xf32, #tpu.memory_space<vmem>>, vector<1x1x32xf32>
    %15 = vector.shape_cast %14 : vector<1x1x32xf32> to vector<32xf32>
    %cst = arith.constant dense<0.000000e+00> : vector<16xf32>
    %16 = vector.multi_reduction <add>, %3, %cst [1] : vector<16x32xf32> to vector<16xf32>
    %17 = vector.shape_cast %16 : vector<16xf32> to vector<16x1xf32>
    %cst_15 = arith.constant 3.200000e+01 : f32
    %18 = vector.broadcast %cst_15 : f32 to vector<16x1xf32>
    %19 = arith.divf %17, %18 : vector<16x1xf32>
    %20 = vector.broadcast %19 : vector<16x1xf32> to vector<16x32xf32>
    %21 = arith.subf %3, %20 : vector<16x32xf32>
    %22 = arith.mulf %21, %21 : vector<16x32xf32>
    %cst_16 = arith.constant dense<0.000000e+00> : vector<16xf32>
    %23 = vector.multi_reduction <add>, %22, %cst_16 [1] : vector<16x32xf32> to vector<16xf32>
    %24 = vector.shape_cast %23 : vector<16xf32> to vector<16x1xf32>
    %cst_17 = arith.constant 3.200000e+01 : f32
    %25 = vector.broadcast %cst_17 : f32 to vector<16x1xf32>
    %26 = arith.divf %24, %25 : vector<16x1xf32>
    %27 = vector.broadcast %19 : vector<16x1xf32> to vector<16x32xf32>
    %28 = arith.subf %3, %27 : vector<16x32xf32>
    %cst_18 = arith.constant 9.99999974E-6 : f32
    %29 = vector.broadcast %cst_18 : f32 to vector<16x1xf32>
    %30 = arith.addf %26, %29 : vector<16x1xf32>
    %31 = math.rsqrt %30 : vector<16x1xf32>
    %32 = vector.broadcast %31 : vector<16x1xf32> to vector<16x32xf32>
    %33 = arith.mulf %28, %32 : vector<16x32xf32>
    %34 = vector.shape_cast %5 : vector<32xf32> to vector<1x32xf32>
    %35 = vector.broadcast %34 : vector<1x32xf32> to vector<16x32xf32>
    %36 = arith.mulf %33, %35 : vector<16x32xf32>
    %37 = vector.shape_cast %7 : vector<32xf32> to vector<1x32xf32>
    %38 = vector.broadcast %37 : vector<1x32xf32> to vector<16x32xf32>
    %39 = arith.addf %36, %38 : vector<16x32xf32>
    %40 = arith.truncf %39 : vector<16x32xf32> to vector<16x32xbf16>
    %c0_19 = arith.constant 0 : index
    %c0_20 = arith.constant 0 : index
    %c0_21 = arith.constant 0 : index
    %41 = vector.load %arg7[%c0_19, %c0_20, %c0_21] : memref<1x32x96xbf16, #tpu.memory_space<vmem>>, vector<1x32x96xbf16>
    %42 = vector.shape_cast %41 : vector<1x32x96xbf16> to vector<32x96xbf16>
    %cst_22 = arith.constant dense<0.000000e+00> : vector<16x96xf32>
    %43 = tpu.matmul %40, %42, %cst_22 {dimension_numbers = #tpu.dot_dimension_numbers<[1], [0], [0], [1], [0, 0, 1, 1], [], []>} : vector<16x32xbf16>, vector<32x96xbf16>, vector<16x96xf32> -> vector<16x96xf32>
    %c0_23 = arith.constant 0 : index
    %c0_24 = arith.constant 0 : index
    %c0_25 = arith.constant 0 : index
    %44 = vector.load %arg12[%c0_23, %c0_24, %c0_25] : memref<1x1x96xf32, #tpu.memory_space<vmem>>, vector<1x1x96xf32>
    %45 = vector.shape_cast %44 : vector<1x1x96xf32> to vector<1x96xf32>
    %46 = vector.broadcast %45 : vector<1x96xf32> to vector<16x96xf32>
    %47 = arith.addf %43, %46 : vector<16x96xf32>
    %48 = vector.extract_strided_slice %47 {offsets = [0, 0], sizes = [16, 8], strides = [1, 1]} : vector<16x96xf32> to vector<16x8xf32>
    %49 = arith.truncf %48 : vector<16x8xf32> to vector<16x8xbf16>
    %50 = vector.extract_strided_slice %47 {offsets = [0, 32], sizes = [16, 8], strides = [1, 1]} : vector<16x96xf32> to vector<16x8xf32>
    %51 = arith.truncf %50 : vector<16x8xf32> to vector<16x8xbf16>
    %52 = vector.extract_strided_slice %47 {offsets = [0, 64], sizes = [16, 8], strides = [1, 1]} : vector<16x96xf32> to vector<16x8xf32>
    %53 = arith.truncf %52 : vector<16x8xf32> to vector<16x8xbf16>
    %cst_26 = arith.constant dense<0.000000e+00> : vector<16x16xf32>
    %54 = tpu.matmul %49, %51, %cst_26 {dimension_numbers = #tpu.dot_dimension_numbers<[1], [1], [0], [0], [0, 0, 1, 0], [], []>} : vector<16x8xbf16>, vector<16x8xbf16>, vector<16x16xf32> -> vector<16x16xf32>
    %cst_27 = arith.constant dense<0xFF800000> : vector<16xf32>
    %55 = vector.multi_reduction <maximumf>, %54, %cst_27 [1] : vector<16x16xf32> to vector<16xf32>
    %56 = vector.shape_cast %55 : vector<16xf32> to vector<16x1xf32>
    %57 = vector.broadcast %56 : vector<16x1xf32> to vector<16x16xf32>
    %58 = arith.subf %54, %57 : vector<16x16xf32>
    %59 = math.exp %58 : vector<16x16xf32>
    %cst_28 = arith.constant dense<0.000000e+00> : vector<16xf32>
    %60 = vector.multi_reduction <add>, %59, %cst_28 [1] : vector<16x16xf32> to vector<16xf32>
    %61 = vector.shape_cast %60 : vector<16xf32> to vector<16x1xf32>
    %62 = tpu.reciprocal %61 {approx = true} : vector<16x1xf32> -> vector<16x1xf32>
    %63 = arith.mulf %61, %62 : vector<16x1xf32>
    %cst_29 = arith.constant 2.000000e+00 : f32
    %64 = vector.broadcast %cst_29 : f32 to vector<16x1xf32>
    %65 = arith.subf %64, %63 : vector<16x1xf32>
    %66 = arith.mulf %62, %65 : vector<16x1xf32>
    %67 = vector.broadcast %66 : vector<16x1xf32> to vector<16x16xf32>
    %68 = arith.mulf %59, %67 : vector<16x16xf32>
    %69 = arith.truncf %68 : vector<16x16xf32> to vector<16x16xbf16>
    %cst_30 = arith.constant dense<0.000000e+00> : vector<16x8xf32>
    %70 = tpu.matmul %69, %53, %cst_30 {dimension_numbers = #tpu.dot_dimension_numbers<[1], [0], [0], [1], [0, 0, 1, 1], [], []>} : vector<16x16xbf16>, vector<16x8xbf16>, vector<16x8xf32> -> vector<16x8xf32>
    %71 = vector.extract_strided_slice %47 {offsets = [0, 8], sizes = [16, 8], strides = [1, 1]} : vector<16x96xf32> to vector<16x8xf32>
    %72 = arith.truncf %71 : vector<16x8xf32> to vector<16x8xbf16>
    %73 = vector.extract_strided_slice %47 {offsets = [0, 40], sizes = [16, 8], strides = [1, 1]} : vector<16x96xf32> to vector<16x8xf32>
    %74 = arith.truncf %73 : vector<16x8xf32> to vector<16x8xbf16>
    %75 = vector.extract_strided_slice %47 {offsets = [0, 72], sizes = [16, 8], strides = [1, 1]} : vector<16x96xf32> to vector<16x8xf32>
    %76 = arith.truncf %75 : vector<16x8xf32> to vector<16x8xbf16>
    %cst_31 = arith.constant dense<0.000000e+00> : vector<16x16xf32>
    %77 = tpu.matmul %72, %74, %cst_31 {dimension_numbers = #tpu.dot_dimension_numbers<[1], [1], [0], [0], [0, 0, 1, 0], [], []>} : vector<16x8xbf16>, vector<16x8xbf16>, vector<16x16xf32> -> vector<16x16xf32>
    %cst_32 = arith.constant dense<0xFF800000> : vector<16xf32>
    %78 = vector.multi_reduction <maximumf>, %77, %cst_32 [1] : vector<16x16xf32> to vector<16xf32>
    %79 = vector.shape_cast %78 : vector<16xf32> to vector<16x1xf32>
    %80 = vector.broadcast %79 : vector<16x1xf32> to vector<16x16xf32>
    %81 = arith.subf %77, %80 : vector<16x16xf32>
    %82 = math.exp %81 : vector<16x16xf32>
    %cst_33 = arith.constant dense<0.000000e+00> : vector<16xf32>
    %83 = vector.multi_reduction <add>, %82, %cst_33 [1] : vector<16x16xf32> to vector<16xf32>
    %84 = vector.shape_cast %83 : vector<16xf32> to vector<16x1xf32>
    %85 = tpu.reciprocal %84 {approx = true} : vector<16x1xf32> -> vector<16x1xf32>
    %86 = arith.mulf %84, %85 : vector<16x1xf32>
    %cst_34 = arith.constant 2.000000e+00 : f32
    %87 = vector.broadcast %cst_34 : f32 to vector<16x1xf32>
    %88 = arith.subf %87, %86 : vector<16x1xf32>
    %89 = arith.mulf %85, %88 : vector<16x1xf32>
    %90 = vector.broadcast %89 : vector<16x1xf32> to vector<16x16xf32>
    %91 = arith.mulf %82, %90 : vector<16x16xf32>
    %92 = arith.truncf %91 : vector<16x16xf32> to vector<16x16xbf16>
    %cst_35 = arith.constant dense<0.000000e+00> : vector<16x8xf32>
    %93 = tpu.matmul %92, %76, %cst_35 {dimension_numbers = #tpu.dot_dimension_numbers<[1], [0], [0], [1], [0, 0, 1, 1], [], []>} : vector<16x16xbf16>, vector<16x8xbf16>, vector<16x8xf32> -> vector<16x8xf32>
    %94 = vector.extract_strided_slice %47 {offsets = [0, 16], sizes = [16, 8], strides = [1, 1]} : vector<16x96xf32> to vector<16x8xf32>
    %95 = arith.truncf %94 : vector<16x8xf32> to vector<16x8xbf16>
    %96 = vector.extract_strided_slice %47 {offsets = [0, 48], sizes = [16, 8], strides = [1, 1]} : vector<16x96xf32> to vector<16x8xf32>
    %97 = arith.truncf %96 : vector<16x8xf32> to vector<16x8xbf16>
    %98 = vector.extract_strided_slice %47 {offsets = [0, 80], sizes = [16, 8], strides = [1, 1]} : vector<16x96xf32> to vector<16x8xf32>
    %99 = arith.truncf %98 : vector<16x8xf32> to vector<16x8xbf16>
    %cst_36 = arith.constant dense<0.000000e+00> : vector<16x16xf32>
    %100 = tpu.matmul %95, %97, %cst_36 {dimension_numbers = #tpu.dot_dimension_numbers<[1], [1], [0], [0], [0, 0, 1, 0], [], []>} : vector<16x8xbf16>, vector<16x8xbf16>, vector<16x16xf32> -> vector<16x16xf32>
    %cst_37 = arith.constant dense<0xFF800000> : vector<16xf32>
    %101 = vector.multi_reduction <maximumf>, %100, %cst_37 [1] : vector<16x16xf32> to vector<16xf32>
    %102 = vector.shape_cast %101 : vector<16xf32> to vector<16x1xf32>
    %103 = vector.broadcast %102 : vector<16x1xf32> to vector<16x16xf32>
    %104 = arith.subf %100, %103 : vector<16x16xf32>
    %105 = math.exp %104 : vector<16x16xf32>
    %cst_38 = arith.constant dense<0.000000e+00> : vector<16xf32>
    %106 = vector.multi_reduction <add>, %105, %cst_38 [1] : vector<16x16xf32> to vector<16xf32>
    %107 = vector.shape_cast %106 : vector<16xf32> to vector<16x1xf32>
    %108 = tpu.reciprocal %107 {approx = true} : vector<16x1xf32> -> vector<16x1xf32>
    %109 = arith.mulf %107, %108 : vector<16x1xf32>
    %cst_39 = arith.constant 2.000000e+00 : f32
    %110 = vector.broadcast %cst_39 : f32 to vector<16x1xf32>
    %111 = arith.subf %110, %109 : vector<16x1xf32>
    %112 = arith.mulf %108, %111 : vector<16x1xf32>
    %113 = vector.broadcast %112 : vector<16x1xf32> to vector<16x16xf32>
    %114 = arith.mulf %105, %113 : vector<16x16xf32>
    %115 = arith.truncf %114 : vector<16x16xf32> to vector<16x16xbf16>
    %cst_40 = arith.constant dense<0.000000e+00> : vector<16x8xf32>
    %116 = tpu.matmul %115, %99, %cst_40 {dimension_numbers = #tpu.dot_dimension_numbers<[1], [0], [0], [1], [0, 0, 1, 1], [], []>} : vector<16x16xbf16>, vector<16x8xbf16>, vector<16x8xf32> -> vector<16x8xf32>
    %117 = vector.extract_strided_slice %47 {offsets = [0, 24], sizes = [16, 8], strides = [1, 1]} : vector<16x96xf32> to vector<16x8xf32>
    %118 = arith.truncf %117 : vector<16x8xf32> to vector<16x8xbf16>
    %119 = vector.extract_strided_slice %47 {offsets = [0, 56], sizes = [16, 8], strides = [1, 1]} : vector<16x96xf32> to vector<16x8xf32>
    %120 = arith.truncf %119 : vector<16x8xf32> to vector<16x8xbf16>
    %121 = vector.extract_strided_slice %47 {offsets = [0, 88], sizes = [16, 8], strides = [1, 1]} : vector<16x96xf32> to vector<16x8xf32>
    %122 = arith.truncf %121 : vector<16x8xf32> to vector<16x8xbf16>
    %cst_41 = arith.constant dense<0.000000e+00> : vector<16x16xf32>
    %123 = tpu.matmul %118, %120, %cst_41 {dimension_numbers = #tpu.dot_dimension_numbers<[1], [1], [0], [0], [0, 0, 1, 0], [], []>} : vector<16x8xbf16>, vector<16x8xbf16>, vector<16x16xf32> -> vector<16x16xf32>
    %cst_42 = arith.constant dense<0xFF800000> : vector<16xf32>
    %124 = vector.multi_reduction <maximumf>, %123, %cst_42 [1] : vector<16x16xf32> to vector<16xf32>
    %125 = vector.shape_cast %124 : vector<16xf32> to vector<16x1xf32>
    %126 = vector.broadcast %125 : vector<16x1xf32> to vector<16x16xf32>
    %127 = arith.subf %123, %126 : vector<16x16xf32>
    %128 = math.exp %127 : vector<16x16xf32>
    %cst_43 = arith.constant dense<0.000000e+00> : vector<16xf32>
    %129 = vector.multi_reduction <add>, %128, %cst_43 [1] : vector<16x16xf32> to vector<16xf32>
    %130 = vector.shape_cast %129 : vector<16xf32> to vector<16x1xf32>
    %131 = tpu.reciprocal %130 {approx = true} : vector<16x1xf32> -> vector<16x1xf32>
    %132 = arith.mulf %130, %131 : vector<16x1xf32>
    %cst_44 = arith.constant 2.000000e+00 : f32
    %133 = vector.broadcast %cst_44 : f32 to vector<16x1xf32>
    %134 = arith.subf %133, %132 : vector<16x1xf32>
    %135 = arith.mulf %131, %134 : vector<16x1xf32>
    %136 = vector.broadcast %135 : vector<16x1xf32> to vector<16x16xf32>
    %137 = arith.mulf %128, %136 : vector<16x16xf32>
    %138 = arith.truncf %137 : vector<16x16xf32> to vector<16x16xbf16>
    %cst_45 = arith.constant dense<0.000000e+00> : vector<16x8xf32>
    %139 = tpu.matmul %138, %122, %cst_45 {dimension_numbers = #tpu.dot_dimension_numbers<[1], [0], [0], [1], [0, 0, 1, 1], [], []>} : vector<16x16xbf16>, vector<16x8xbf16>, vector<16x8xf32> -> vector<16x8xf32>
    %140 = tpu.concatenate %70, %93, %116, %139 in 1 : vector<16x8xf32>, vector<16x8xf32>, vector<16x8xf32>, vector<16x8xf32> -> vector<16x32xf32>
    %141 = arith.truncf %140 : vector<16x32xf32> to vector<16x32xbf16>
    %c0_46 = arith.constant 0 : index
    %c0_47 = arith.constant 0 : index
    %c0_48 = arith.constant 0 : index
    %142 = vector.load %arg8[%c0_46, %c0_47, %c0_48] : memref<1x32x32xbf16, #tpu.memory_space<vmem>>, vector<1x32x32xbf16>
    %143 = vector.shape_cast %142 : vector<1x32x32xbf16> to vector<32x32xbf16>
    %cst_49 = arith.constant dense<0.000000e+00> : vector<16x32xf32>
    %144 = tpu.matmul %141, %143, %cst_49 {dimension_numbers = #tpu.dot_dimension_numbers<[1], [0], [0], [1], [0, 0, 1, 1], [], []>} : vector<16x32xbf16>, vector<32x32xbf16>, vector<16x32xf32> -> vector<16x32xf32>
    %145 = vector.shape_cast %13 : vector<32xf32> to vector<1x32xf32>
    %146 = vector.broadcast %145 : vector<1x32xf32> to vector<16x32xf32>
    %147 = arith.addf %144, %146 : vector<16x32xf32>
    %148 = arith.addf %3, %147 : vector<16x32xf32>
    %cst_50 = arith.constant dense<0.000000e+00> : vector<16xf32>
    %149 = vector.multi_reduction <add>, %148, %cst_50 [1] : vector<16x32xf32> to vector<16xf32>
    %150 = vector.shape_cast %149 : vector<16xf32> to vector<16x1xf32>
    %cst_51 = arith.constant 3.200000e+01 : f32
    %151 = vector.broadcast %cst_51 : f32 to vector<16x1xf32>
    %152 = arith.divf %150, %151 : vector<16x1xf32>
    %153 = vector.broadcast %152 : vector<16x1xf32> to vector<16x32xf32>
    %154 = arith.subf %148, %153 : vector<16x32xf32>
    %155 = arith.mulf %154, %154 : vector<16x32xf32>
    %cst_52 = arith.constant dense<0.000000e+00> : vector<16xf32>
    %156 = vector.multi_reduction <add>, %155, %cst_52 [1] : vector<16x32xf32> to vector<16xf32>
    %157 = vector.shape_cast %156 : vector<16xf32> to vector<16x1xf32>
    %cst_53 = arith.constant 3.200000e+01 : f32
    %158 = vector.broadcast %cst_53 : f32 to vector<16x1xf32>
    %159 = arith.divf %157, %158 : vector<16x1xf32>
    %160 = vector.broadcast %152 : vector<16x1xf32> to vector<16x32xf32>
    %161 = arith.subf %148, %160 : vector<16x32xf32>
    %cst_54 = arith.constant 9.99999974E-6 : f32
    %162 = vector.broadcast %cst_54 : f32 to vector<16x1xf32>
    %163 = arith.addf %159, %162 : vector<16x1xf32>
    %164 = math.rsqrt %163 : vector<16x1xf32>
    %165 = vector.broadcast %164 : vector<16x1xf32> to vector<16x32xf32>
    %166 = arith.mulf %161, %165 : vector<16x32xf32>
    %167 = vector.shape_cast %9 : vector<32xf32> to vector<1x32xf32>
    %168 = vector.broadcast %167 : vector<1x32xf32> to vector<16x32xf32>
    %169 = arith.mulf %166, %168 : vector<16x32xf32>
    %170 = vector.shape_cast %11 : vector<32xf32> to vector<1x32xf32>
    %171 = vector.broadcast %170 : vector<1x32xf32> to vector<16x32xf32>
    %172 = arith.addf %169, %171 : vector<16x32xf32>
    %173 = arith.truncf %172 : vector<16x32xf32> to vector<16x32xbf16>
    %c0_55 = arith.constant 0 : index
    %c0_56 = arith.constant 0 : index
    %c0_57 = arith.constant 0 : index
    %174 = vector.load %arg9[%c0_55, %c0_56, %c0_57] : memref<1x32x128xbf16, #tpu.memory_space<vmem>>, vector<1x32x128xbf16>
    %175 = vector.shape_cast %174 : vector<1x32x128xbf16> to vector<32x128xbf16>
    %cst_58 = arith.constant dense<0.000000e+00> : vector<16x128xf32>
    %176 = tpu.matmul %173, %175, %cst_58 {dimension_numbers = #tpu.dot_dimension_numbers<[1], [0], [0], [1], [0, 0, 1, 1], [], []>} : vector<16x32xbf16>, vector<32x128xbf16>, vector<16x128xf32> -> vector<16x128xf32>
    %c0_59 = arith.constant 0 : index
    %c0_60 = arith.constant 0 : index
    %c0_61 = arith.constant 0 : index
    %177 = vector.load %arg13[%c0_59, %c0_60, %c0_61] : memref<1x1x128xf32, #tpu.memory_space<vmem>>, vector<1x1x128xf32>
    %178 = vector.shape_cast %177 : vector<1x1x128xf32> to vector<1x128xf32>
    %179 = vector.broadcast %178 : vector<1x128xf32> to vector<16x128xf32>
    %180 = arith.addf %176, %179 : vector<16x128xf32>
    %cst_62 = arith.constant 0.000000e+00 : f32
    %181 = vector.broadcast %cst_62 : f32 to vector<16x128xf32>
    %182 = arith.maximumf %180, %181 : vector<16x128xf32>
    %183 = arith.truncf %182 : vector<16x128xf32> to vector<16x128xbf16>
    %c0_63 = arith.constant 0 : index
    %c0_64 = arith.constant 0 : index
    %c0_65 = arith.constant 0 : index
    %184 = vector.load %arg10[%c0_63, %c0_64, %c0_65] : memref<1x128x32xbf16, #tpu.memory_space<vmem>>, vector<1x128x32xbf16>
    %185 = vector.shape_cast %184 : vector<1x128x32xbf16> to vector<128x32xbf16>
    %cst_66 = arith.constant dense<0.000000e+00> : vector<16x32xf32>
    %186 = tpu.matmul %183, %185, %cst_66 {dimension_numbers = #tpu.dot_dimension_numbers<[1], [0], [0], [1], [0, 0, 1, 1], [], []>} : vector<16x128xbf16>, vector<128x32xbf16>, vector<16x32xf32> -> vector<16x32xf32>
    %187 = vector.shape_cast %15 : vector<32xf32> to vector<1x32xf32>
    %188 = vector.broadcast %187 : vector<1x32xf32> to vector<16x32xf32>
    %189 = arith.addf %186, %188 : vector<16x32xf32>
    %190 = arith.addf %148, %189 : vector<16x32xf32>
    %191 = arith.addf %190, %3 : vector<16x32xf32>
    %c1_67 = arith.constant 1 : index
    %c0_68 = arith.constant 0 : index
    %192 = vector.load %arg4[%c1_67, %c0_68] : memref<3x32xf32, #tpu.memory_space<vmem>>, vector<1x32xf32>
    %193 = vector.shape_cast %192 : vector<1x32xf32> to vector<32xf32>
    %c2_69 = arith.constant 2 : index
    %c0_70 = arith.constant 0 : index
    %194 = vector.load %arg4[%c2_69, %c0_70] : memref<3x32xf32, #tpu.memory_space<vmem>>, vector<1x32xf32>
    %195 = vector.shape_cast %194 : vector<1x32xf32> to vector<32xf32>
    %cst_71 = arith.constant dense<0.000000e+00> : vector<16xf32>
    %196 = vector.multi_reduction <add>, %191, %cst_71 [1] : vector<16x32xf32> to vector<16xf32>
    %197 = vector.shape_cast %196 : vector<16xf32> to vector<16x1xf32>
    %cst_72 = arith.constant 3.200000e+01 : f32
    %198 = vector.broadcast %cst_72 : f32 to vector<16x1xf32>
    %199 = arith.divf %197, %198 : vector<16x1xf32>
    %200 = vector.broadcast %199 : vector<16x1xf32> to vector<16x32xf32>
    %201 = arith.subf %191, %200 : vector<16x32xf32>
    %202 = arith.mulf %201, %201 : vector<16x32xf32>
    %cst_73 = arith.constant dense<0.000000e+00> : vector<16xf32>
    %203 = vector.multi_reduction <add>, %202, %cst_73 [1] : vector<16x32xf32> to vector<16xf32>
    %204 = vector.shape_cast %203 : vector<16xf32> to vector<16x1xf32>
    %cst_74 = arith.constant 3.200000e+01 : f32
    %205 = vector.broadcast %cst_74 : f32 to vector<16x1xf32>
    %206 = arith.divf %204, %205 : vector<16x1xf32>
    %207 = vector.broadcast %199 : vector<16x1xf32> to vector<16x32xf32>
    %208 = arith.subf %191, %207 : vector<16x32xf32>
    %cst_75 = arith.constant 9.99999974E-6 : f32
    %209 = vector.broadcast %cst_75 : f32 to vector<16x1xf32>
    %210 = arith.addf %206, %209 : vector<16x1xf32>
    %211 = math.rsqrt %210 : vector<16x1xf32>
    %212 = vector.broadcast %211 : vector<16x1xf32> to vector<16x32xf32>
    %213 = arith.mulf %208, %212 : vector<16x32xf32>
    %214 = vector.shape_cast %193 : vector<32xf32> to vector<1x32xf32>
    %215 = vector.broadcast %214 : vector<1x32xf32> to vector<16x32xf32>
    %216 = arith.mulf %213, %215 : vector<16x32xf32>
    %217 = vector.shape_cast %195 : vector<32xf32> to vector<1x32xf32>
    %218 = vector.broadcast %217 : vector<1x32xf32> to vector<16x32xf32>
    %219 = arith.addf %216, %218 : vector<16x32xf32>
    %c0_76 = arith.constant 0 : index
    %c0_77 = arith.constant 0 : index
    %220 = vector.load %arg15[%c0_76, %c0_77] : memref<16x32xf32, #tpu.memory_space<vmem>>, vector<16x32xf32>
    tpu.vector_store %arg15[%c0_76, %c0_77], %219 {strides = array<i32>} : memref<16x32xf32, #tpu.memory_space<vmem>>, vector<16x32xf32>,
    %c1_i32 = arith.constant 1 : i32
    %221 = arith.cmpi eq, %arg1, %c1_i32 : i32
    %222 = arith.extui %221 : i1 to i32
    %c0_i32_78 = arith.constant 0 : i32
    %223 = arith.cmpi ne, %222, %c0_i32_78 : i32
    scf.if %223 {
      %cst_79 = arith.constant 6.250000e-02 : bf16
      %224 = vector.broadcast %cst_79 : bf16 to vector<1x16xbf16>
      %225 = arith.truncf %219 : vector<16x32xf32> to vector<16x32xbf16>
      %cst_80 = arith.constant dense<0.000000e+00> : vector<1x32xf32>
      %226 = tpu.matmul %224, %225, %cst_80 {dimension_numbers = #tpu.dot_dimension_numbers<[1], [0], [0], [1], [0, 0, 1, 1], [], []>} : vector<1x16xbf16>, vector<16x32xbf16>, vector<1x32xf32> -> vector<1x32xf32>
      %227 = arith.truncf %226 : vector<1x32xf32> to vector<1x32xbf16>
      %c0_81 = arith.constant 0 : index
      %c0_82 = arith.constant 0 : index
      %228 = vector.load %arg5[%c0_81, %c0_82] : memref<32x2xbf16, #tpu.memory_space<vmem>>, vector<32x2xbf16>
      %cst_83 = arith.constant dense<0.000000e+00> : vector<1x2xf32>
      %229 = tpu.matmul %227, %228, %cst_83 {dimension_numbers = #tpu.dot_dimension_numbers<[1], [0], [0], [1], [0, 0, 1, 1], [], []>} : vector<1x32xbf16>, vector<32x2xbf16>, vector<1x2xf32> -> vector<1x2xf32>
      %c0_84 = arith.constant 0 : index
      %c0_85 = arith.constant 0 : index
      %230 = vector.load %arg6[%c0_84, %c0_85] : memref<1x2xf32, #tpu.memory_space<vmem>>, vector<1x2xf32>
      %231 = arith.addf %229, %230 : vector<1x2xf32>
      %c0_86 = arith.constant 0 : index
      %c0_87 = arith.constant 0 : index
      %c0_88 = arith.constant 0 : index
      %232 = vector.load %arg14[%c0_86, %c0_87, %c0_88] : memref<1x1x2xf32, #tpu.memory_space<vmem>>, vector<1x1x2xf32>
      %233 = vector.shape_cast %232 : vector<1x1x2xf32> to vector<1x2xf32>
      %234 = vector.shape_cast %231 : vector<1x2xf32> to vector<1x1x2xf32>
      tpu.vector_store %arg14[%c0_86, %c0_87, %c0_88], %234 {strides = array<i32>} : memref<1x1x2xf32, #tpu.memory_space<vmem>>, vector<1x1x2xf32>,
    } else {
    }
    return
  }
  func.func @transform_0(%arg0: i32, %arg1: i32) -> (i32, i32, i32) {
    %c0_i32 = arith.constant 0 : i32
    %c0_i32_0 = arith.constant 0 : i32
    %c0_i32_1 = arith.constant 0 : i32
    return %arg0, %c0_i32, %c0_i32_0 : i32, i32, i32
  }
  func.func @transform_1(%arg0: i32, %arg1: i32) -> (i32, i32) {
    %c0_i32 = arith.constant 0 : i32
    %c0_i32_0 = arith.constant 0 : i32
    %c0_i32_1 = arith.constant 0 : i32
    return %c0_i32, %c0_i32_0 : i32, i32
  }
  func.func @transform_2(%arg0: i32, %arg1: i32) -> (i32, i32) {
    %c0_i32 = arith.constant 0 : i32
    %c0_i32_0 = arith.constant 0 : i32
    %c0_i32_1 = arith.constant 0 : i32
    return %c0_i32, %c0_i32_0 : i32, i32
  }
  func.func @transform_3(%arg0: i32, %arg1: i32) -> (i32, i32) {
    %c0_i32 = arith.constant 0 : i32
    %c0_i32_0 = arith.constant 0 : i32
    %c0_i32_1 = arith.constant 0 : i32
    return %c0_i32, %c0_i32_0 : i32, i32
  }
  func.func @transform_4(%arg0: i32, %arg1: i32) -> (i32, i32) {
    %c0_i32 = arith.constant 0 : i32
    %c0_i32_0 = arith.constant 0 : i32
    %c0_i32_1 = arith.constant 0 : i32
    return %c0_i32, %c0_i32_0 : i32, i32
  }
  func.func @transform_5(%arg0: i32, %arg1: i32) -> (i32, i32, i32) {
    %c0_i32 = arith.constant 0 : i32
    %c0_i32_0 = arith.constant 0 : i32
    %c0_i32_1 = arith.constant 0 : i32
    return %arg1, %c0_i32, %c0_i32_0 : i32, i32, i32
  }
  func.func @transform_6(%arg0: i32, %arg1: i32) -> (i32, i32, i32) {
    %c0_i32 = arith.constant 0 : i32
    %c0_i32_0 = arith.constant 0 : i32
    %c0_i32_1 = arith.constant 0 : i32
    return %arg1, %c0_i32, %c0_i32_0 : i32, i32, i32
  }
  func.func @transform_7(%arg0: i32, %arg1: i32) -> (i32, i32, i32) {
    %c0_i32 = arith.constant 0 : i32
    %c0_i32_0 = arith.constant 0 : i32
    %c0_i32_1 = arith.constant 0 : i32
    return %arg1, %c0_i32, %c0_i32_0 : i32, i32, i32
  }
  func.func @transform_8(%arg0: i32, %arg1: i32) -> (i32, i32, i32) {
    %c0_i32 = arith.constant 0 : i32
    %c0_i32_0 = arith.constant 0 : i32
    %c0_i32_1 = arith.constant 0 : i32
    return %arg1, %c0_i32, %c0_i32_0 : i32, i32, i32
  }
  func.func @transform_9(%arg0: i32, %arg1: i32) -> (i32, i32, i32) {
    %c0_i32 = arith.constant 0 : i32
    %c0_i32_0 = arith.constant 0 : i32
    %c0_i32_1 = arith.constant 0 : i32
    return %arg1, %c0_i32, %c0_i32_0 : i32, i32, i32
  }
  func.func @transform_10(%arg0: i32, %arg1: i32) -> (i32, i32, i32) {
    %c0_i32 = arith.constant 0 : i32
    %c0_i32_0 = arith.constant 0 : i32
    %c0_i32_1 = arith.constant 0 : i32
    return %arg1, %c0_i32, %c0_i32_0 : i32, i32, i32
  }
  func.func @transform_11(%arg0: i32, %arg1: i32) -> (i32, i32, i32) {
    %c0_i32 = arith.constant 0 : i32
    %c0_i32_0 = arith.constant 0 : i32
    %c0_i32_1 = arith.constant 0 : i32
    return %arg1, %c0_i32, %c0_i32_0 : i32, i32, i32
  }
  func.func @transform_12(%arg0: i32, %arg1: i32) -> (i32, i32, i32) {
    %c0_i32 = arith.constant 0 : i32
    %c0_i32_0 = arith.constant 0 : i32
    %c0_i32_1 = arith.constant 0 : i32
    return %arg0, %c0_i32, %c0_i32_0 : i32, i32, i32
  }
}

</mosaic_0001>

<llo_original>
// kernel: tpu_custom_call.1
$region0: #{tpu_custom_call.1}
  #allocation0 [shape = 'u32[]', space=smem, size = 0x4, offset = 0x4, fixed_abs, tag = 'smem constant byte address 0x4 - core index']
  #allocation1 [shape = 'u32[144,128]{1,0:T(1,128)}', space=vmem, size = 0x12000, scoped, tag = 'internal scratch']
  #allocation2 [shape = 'f32[16,32]{1,0:T(8,128)}', space=vmem, size = 0x2000, scoped, tag = 'scratch operand']
  %s0 = inlined_call_operand.vmem [shape: f32[2,16,2], index: 0, kind: input, shape index: {}]
  %s1 = inlined_call_operand.vmem [shape: bf16[2,32], index: 1, kind: input, shape index: {}]
  %s2 = inlined_call_operand.vmem [shape: f32[3,32], index: 2, kind: input, shape index: {}]
  %s3 = inlined_call_operand.vmem [shape: bf16[32,2], index: 3, kind: input, shape index: {}]
  %s4 = inlined_call_operand.vmem [shape: f32[1,2], index: 4, kind: input, shape index: {}]
  %s5 = inlined_call_operand.vmem [shape: bf16[2,32,96], index: 5, kind: input, shape index: {}]
  %s6 = inlined_call_operand.vmem [shape: bf16[2,32,32], index: 6, kind: input, shape index: {}]
  %s7 = inlined_call_operand.vmem [shape: bf16[2,32,128], index: 7, kind: input, shape index: {}]
  %s8 = inlined_call_operand.vmem [shape: bf16[2,128,32], index: 8, kind: input, shape index: {}]
  %s9 = inlined_call_operand.vmem [shape: f32[2,6,32], index: 9, kind: input, shape index: {}]
  %s10 = inlined_call_operand.vmem [shape: f32[2,1,96], index: 10, kind: input, shape index: {}]
  %s11 = inlined_call_operand.vmem [shape: f32[2,1,128], index: 11, kind: input, shape index: {}]
  %s12 = inlined_call_operand.hbm [shape: f32[2,1,2], index: 12, kind: output, shape index: {}]
  %s13 = sld [smem:[#allocation0]]
  $region89: #{tpu_custom_call.1} parent=0
    _
  %s15 = ssub.s32 1, %s13
  %s16 = scalar_select 0, %s15, %s13
  $region1: #{tpu_custom_call.1} parent=0
    #allocation3 [shape = 'u8[1024]{0}', space=vmem, size = 0x400, scoped, tag = 'output window, operand 0']
    #allocation4 [shape = 's32[2]{0}', space=sflag, size = 0x8, scoped, tag = 'scoped memory for tpu_custom_call.1']
    %17 = vsyncpa [#allocation4], 0
    %s18 = scalar_lea.sflag [#allocation4], 1
    %19 = vsyncpa %s18, 0
    loop: start=0, step=1, limit=6
    $region2: #{tpu_custom_call.1} parent=1 // loop_pre_header
      _
    $region3: #{tpu_custom_call.1} parent=1 // loop_header
      %s21 = sphi 0, %s25
      %p22 = scmp.ge.s32.totalorder %s21, 6
      %s28 = sphi 0, %s40
      %s29 = sphi 0, %s36
      %s30 = sphi 0, %s28
      %s31 = sphi 0, %s29
      %s32 = sphi 0, %s30
      %s33 = sphi 0, %s31
      %s43 = sphi 0, %s45
      %s46 = sphi 0, %s43
      %s47 = sphi 0, %s46
      %s63 = sphi 0, %s47
      %s67 = sphi 0, %s67
      %s69 = sphi 0, %s67
      %s70 = sphi 0, %s69
      %s84 = sphi 0, %s70
      %s88 = sphi 0, %s88
      %s90 = sphi 0, %s88
      %s91 = sphi 0, %s90
      %s105 = sphi 0, %s91
      %s109 = sphi 0, %s109
      %s111 = sphi 0, %s109
      %s112 = sphi 0, %s111
      %s126 = sphi 0, %s112
      %s130 = sphi 0, %s130
      %s132 = sphi 0, %s130
      %s133 = sphi 0, %s132
      %s147 = sphi 0, %s133
      %s153 = sphi 0, %s155
      %s156 = sphi 0, %s153
      %s157 = sphi 0, %s156
      %s173 = sphi 0, %s157
      %s179 = sphi 0, %s181
      %s182 = sphi 0, %s179
      %s183 = sphi 0, %s182
      %s199 = sphi 0, %s183
      %s205 = sphi 0, %s207
      %s208 = sphi 0, %s205
      %s209 = sphi 0, %s208
      %s225 = sphi 0, %s209
      %s231 = sphi 0, %s233
      %s234 = sphi 0, %s231
      %s235 = sphi 0, %s234
      %s251 = sphi 0, %s235
      %s257 = sphi 0, %s259
      %s260 = sphi 0, %s257
      %s261 = sphi 0, %s260
      %s277 = sphi 0, %s261
      %s283 = sphi 0, %s285
      %s286 = sphi 0, %s283
      %s287 = sphi 0, %s286
      %s303 = sphi 0, %s287
      %s309 = sphi 0, %s311
      %s312 = sphi 0, %s309
      %s313 = sphi 0, %s312
      %s329 = sphi 0, %s313
      %s335 = sphi 0, %s337
      %s338 = sphi 0, %s335
      %s339 = sphi 0, %s338
      %s355 = sphi 0, %s339
    $region4: #{tpu_custom_call.1} parent=1 // loop_header_branch
      %24 = sbr.rel (%p22) target = $region8
    $region5: #{tpu_custom_call.1} parent=1 // loop_body
      %s26 = ssub.s32 %s21, 1
      %s27 = ssub.s32 %s21, 2
      %s34 = sadd.s32 1, %s29
      %p35 = scmp.ge.s32.totalorder %s34, 2
      %s36 = scalar_select %p35, 0, %s34
      %s37 = sadd.s32 1, %s28
      %s38 = scalar_select %p35, %s37, %s28
      %p39 = scmp.ge.s32.totalorder %s38, 2
      %s40 = scalar_select %p39, 0, %s38
      %s41 = ssub.s32 %s28, %s40
      %p42 = scmp.eq.s32.totalorder %s41, 0
      %s44 = sadd.s32 %s43, 1
      %s45 = scalar_select %p42, %s43, %s44
      %p48 = pneg %p42
      %p49 = scmp.eq.s32.totalorder %s21, 3
      %p50 = por %p48, %p49
      %p51 = scmp.ne.s32.totalorder %s43, %s46
      %p52 = scmp.eq.s32.totalorder %s21, 0
      %p53 = por %p51, %p52
      %p54 = scmp.ne.s32.totalorder %s43, %s46
      %p55 = scmp.eq.s32.totalorder %s26, 3
      %p56 = por %p54, %p55
      %p57 = scmp.ne.s32.totalorder %s46, %s47
      %p58 = scmp.eq.s32.totalorder %s26, 0
      %p59 = por %p57, %p58
      %p60 = scmp.ne.s32.totalorder %s46, %s47
      %p61 = scmp.eq.s32.totalorder %s27, 3
      %p62 = por %p60, %p61
      %p64 = scmp.ne.s32.totalorder %s47, %s63
      %p65 = scmp.eq.s32.totalorder %s27, 0
      %p66 = por %p64, %p65
      %s68 = sadd.s32 %s67, 1
      %p71 = scmp.eq.s32.totalorder %s21, 3
      %p72 = scmp.ne.s32.totalorder %s67, %s69
      %p73 = scmp.eq.s32.totalorder %s21, 0
      %p74 = por %p72, %p73
      %p75 = scmp.ne.s32.totalorder %s67, %s69
      %p76 = scmp.eq.s32.totalorder %s26, 3
      %p77 = por %p75, %p76
      %p78 = scmp.ne.s32.totalorder %s69, %s70
      %p79 = scmp.eq.s32.totalorder %s26, 0
      %p80 = por %p78, %p79
      %p81 = scmp.ne.s32.totalorder %s69, %s70
      %p82 = scmp.eq.s32.totalorder %s27, 3
      %p83 = por %p81, %p82
      %p85 = scmp.ne.s32.totalorder %s70, %s84
      %p86 = scmp.eq.s32.totalorder %s27, 0
      %p87 = por %p85, %p86
      %s89 = sadd.s32 %s88, 1
      %p92 = scmp.eq.s32.totalorder %s21, 3
      %p93 = scmp.ne.s32.totalorder %s88, %s90
      %p94 = scmp.eq.s32.totalorder %s21, 0
      %p95 = por %p93, %p94
      %p96 = scmp.ne.s32.totalorder %s88, %s90
      %p97 = scmp.eq.s32.totalorder %s26, 3
      %p98 = por %p96, %p97
      %p99 = scmp.ne.s32.totalorder %s90, %s91
      %p100 = scmp.eq.s32.totalorder %s26, 0
      %p101 = por %p99, %p100
      %p102 = scmp.ne.s32.totalorder %s90, %s91
      %p103 = scmp.eq.s32.totalorder %s27, 3
      %p104 = por %p102, %p103
      %p106 = scmp.ne.s32.totalorder %s91, %s105
      %p107 = scmp.eq.s32.totalorder %s27, 0
      %p108 = por %p106, %p107
      %s110 = sadd.s32 %s109, 1
      %p113 = scmp.eq.s32.totalorder %s21, 3
      %p114 = scmp.ne.s32.totalorder %s109, %s111
      %p115 = scmp.eq.s32.totalorder %s21, 0
      %p116 = por %p114, %p115
      %p117 = scmp.ne.s32.totalorder %s109, %s111
      %p118 = scmp.eq.s32.totalorder %s26, 3
      %p119 = por %p117, %p118
      %p120 = scmp.ne.s32.totalorder %s111, %s112
      %p121 = scmp.eq.s32.totalorder %s26, 0
      %p122 = por %p120, %p121
      %p123 = scmp.ne.s32.totalorder %s111, %s112
      %p124 = scmp.eq.s32.totalorder %s27, 3
      %p125 = por %p123, %p124
      %p127 = scmp.ne.s32.totalorder %s112, %s126
      %p128 = scmp.eq.s32.totalorder %s27, 0
      %p129 = por %p127, %p128
      %s131 = sadd.s32 %s130, 1
      %p134 = scmp.eq.s32.totalorder %s21, 3
      %p135 = scmp.ne.s32.totalorder %s130, %s132
      %p136 = scmp.eq.s32.totalorder %s21, 0
      %p137 = por %p135, %p136
      %p138 = scmp.ne.s32.totalorder %s130, %s132
      %p139 = scmp.eq.s32.totalorder %s26, 3
      %p140 = por %p138, %p139
      %p141 = scmp.ne.s32.totalorder %s132, %s133
      %p142 = scmp.eq.s32.totalorder %s26, 0
      %p143 = por %p141, %p142
      %p144 = scmp.ne.s32.totalorder %s132, %s133
      %p145 = scmp.eq.s32.totalorder %s27, 3
      %p146 = por %p144, %p145
      %p148 = scmp.ne.s32.totalorder %s133, %s147
      %p149 = scmp.eq.s32.totalorder %s27, 0
      %p150 = por %p148, %p149
      %s151 = ssub.s32 %s29, %s36
      %p152 = scmp.eq.s32.totalorder %s151, 0
      %s154 = sadd.s32 %s153, 1
      %s155 = scalar_select %p152, %s153, %s154
      %p158 = pneg %p152
      %p159 = scmp.eq.s32.totalorder %s21, 3
      %p160 = por %p158, %p159
      %p161 = scmp.ne.s32.totalorder %s153, %s156
      %p162 = scmp.eq.s32.totalorder %s21, 0
      %p163 = por %p161, %p162
      %p164 = scmp.ne.s32.totalorder %s153, %s156
      %p165 = scmp.eq.s32.totalorder %s26, 3
      %p166 = por %p164, %p165
      %p167 = scmp.ne.s32.totalorder %s156, %s157
      %p168 = scmp.eq.s32.totalorder %s26, 0
      %p169 = por %p167, %p168
      %p170 = scmp.ne.s32.totalorder %s156, %s157
      %p171 = scmp.eq.s32.totalorder %s27, 3
      %p172 = por %p170, %p171
      %p174 = scmp.ne.s32.totalorder %s157, %s173
      %p175 = scmp.eq.s32.totalorder %s27, 0
      %p176 = por %p174, %p175
      %s177 = ssub.s32 %s29, %s36
      %p178 = scmp.eq.s32.totalorder %s177, 0
      %s180 = sadd.s32 %s179, 1
      %s181 = scalar_select %p178, %s179, %s180
      %p184 = pneg %p178
      %p185 = scmp.eq.s32.totalorder %s21, 3
      %p186 = por %p184, %p185
      %p187 = scmp.ne.s32.totalorder %s179, %s182
      %p188 = scmp.eq.s32.totalorder %s21, 0
      %p189 = por %p187, %p188
      %p190 = scmp.ne.s32.totalorder %s179, %s182
      %p191 = scmp.eq.s32.totalorder %s26, 3
      %p192 = por %p190, %p191
      %p193 = scmp.ne.s32.totalorder %s182, %s183
      %p194 = scmp.eq.s32.totalorder %s26, 0
      %p195 = por %p193, %p194
      %p196 = scmp.ne.s32.totalorder %s182, %s183
      %p197 = scmp.eq.s32.totalorder %s27, 3
      %p198 = por %p196, %p197
      %p200 = scmp.ne.s32.totalorder %s183, %s199
      %p201 = scmp.eq.s32.totalorder %s27, 0
      %p202 = por %p200, %p201
      %s203 = ssub.s32 %s29, %s36
      %p204 = scmp.eq.s32.totalorder %s203, 0
      %s206 = sadd.s32 %s205, 1
      %s207 = scalar_select %p204, %s205, %s206
      %p210 = pneg %p204
      %p211 = scmp.eq.s32.totalorder %s21, 3
      %p212 = por %p210, %p211
      %p213 = scmp.ne.s32.totalorder %s205, %s208
      %p214 = scmp.eq.s32.totalorder %s21, 0
      %p215 = por %p213, %p214
      %p216 = scmp.ne.s32.totalorder %s205, %s208
      %p217 = scmp.eq.s32.totalorder %s26, 3
      %p218 = por %p216, %p217
      %p219 = scmp.ne.s32.totalorder %s208, %s209
      %p220 = scmp.eq.s32.totalorder %s26, 0
      %p221 = por %p219, %p220
      %p222 = scmp.ne.s32.totalorder %s208, %s209
      %p223 = scmp.eq.s32.totalorder %s27, 3
      %p224 = por %p222, %p223
      %p226 = scmp.ne.s32.totalorder %s209, %s225
      %p227 = scmp.eq.s32.totalorder %s27, 0
      %p228 = por %p226, %p227
      %s229 = ssub.s32 %s29, %s36
      %p230 = scmp.eq.s32.totalorder %s229, 0
      %s232 = sadd.s32 %s231, 1
      %s233 = scalar_select %p230, %s231, %s232
      %p236 = pneg %p230
      %p237 = scmp.eq.s32.totalorder %s21, 3
      %p238 = por %p236, %p237
      %p239 = scmp.ne.s32.totalorder %s231, %s234
      %p240 = scmp.eq.s32.totalorder %s21, 0
      %p241 = por %p239, %p240
      %p242 = scmp.ne.s32.totalorder %s231, %s234
      %p243 = scmp.eq.s32.totalorder %s26, 3
      %p244 = por %p242, %p243
      %p245 = scmp.ne.s32.totalorder %s234, %s235
      %p246 = scmp.eq.s32.totalorder %s26, 0
      %p247 = por %p245, %p246
      %p248 = scmp.ne.s32.totalorder %s234, %s235
      %p249 = scmp.eq.s32.totalorder %s27, 3
      %p250 = por %p248, %p249
      %p252 = scmp.ne.s32.totalorder %s235, %s251
      %p253 = scmp.eq.s32.totalorder %s27, 0
      %p254 = por %p252, %p253
      %s255 = ssub.s32 %s29, %s36
      %p256 = scmp.eq.s32.totalorder %s255, 0
      %s258 = sadd.s32 %s257, 1
      %s259 = scalar_select %p256, %s257, %s258
      %p262 = pneg %p256
      %p263 = scmp.eq.s32.totalorder %s21, 3
      %p264 = por %p262, %p263
      %p265 = scmp.ne.s32.totalorder %s257, %s260
      %p266 = scmp.eq.s32.totalorder %s21, 0
      %p267 = por %p265, %p266
      %p268 = scmp.ne.s32.totalorder %s257, %s260
      %p269 = scmp.eq.s32.totalorder %s26, 3
      %p270 = por %p268, %p269
      %p271 = scmp.ne.s32.totalorder %s260, %s261
      %p272 = scmp.eq.s32.totalorder %s26, 0
      %p273 = por %p271, %p272
      %p274 = scmp.ne.s32.totalorder %s260, %s261
      %p275 = scmp.eq.s32.totalorder %s27, 3
      %p276 = por %p274, %p275
      %p278 = scmp.ne.s32.totalorder %s261, %s277
      %p279 = scmp.eq.s32.totalorder %s27, 0
      %p280 = por %p278, %p279
      %s281 = ssub.s32 %s29, %s36
      %p282 = scmp.eq.s32.totalorder %s281, 0
      %s284 = sadd.s32 %s283, 1
      %s285 = scalar_select %p282, %s283, %s284
      %p288 = pneg %p282
      %p289 = scmp.eq.s32.totalorder %s21, 3
      %p290 = por %p288, %p289
      %p291 = scmp.ne.s32.totalorder %s283, %s286
      %p292 = scmp.eq.s32.totalorder %s21, 0
      %p293 = por %p291, %p292
      %p294 = scmp.ne.s32.totalorder %s283, %s286
      %p295 = scmp.eq.s32.totalorder %s26, 3
      %p296 = por %p294, %p295
      %p297 = scmp.ne.s32.totalorder %s286, %s287
      %p298 = scmp.eq.s32.totalorder %s26, 0
      %p299 = por %p297, %p298
      %p300 = scmp.ne.s32.totalorder %s286, %s287
      %p301 = scmp.eq.s32.totalorder %s27, 3
      %p302 = por %p300, %p301
      %p304 = scmp.ne.s32.totalorder %s287, %s303
      %p305 = scmp.eq.s32.totalorder %s27, 0
      %p306 = por %p304, %p305
      %s307 = ssub.s32 %s29, %s36
      %p308 = scmp.eq.s32.totalorder %s307, 0
      %s310 = sadd.s32 %s309, 1
      %s311 = scalar_select %p308, %s309, %s310
      %p314 = pneg %p308
      %p315 = scmp.eq.s32.totalorder %s21, 3
      %p316 = por %p314, %p315
      %p317 = scmp.ne.s32.totalorder %s309, %s312
      %p318 = scmp.eq.s32.totalorder %s21, 0
      %p319 = por %p317, %p318
      %p320 = scmp.ne.s32.totalorder %s309, %s312
      %p321 = scmp.eq.s32.totalorder %s26, 3
      %p322 = por %p320, %p321
      %p323 = scmp.ne.s32.totalorder %s312, %s313
      %p324 = scmp.eq.s32.totalorder %s26, 0
      %p325 = por %p323, %p324
      %p326 = scmp.ne.s32.totalorder %s312, %s313
      %p327 = scmp.eq.s32.totalorder %s27, 3
      %p328 = por %p326, %p327
      %p330 = scmp.ne.s32.totalorder %s313, %s329
      %p331 = scmp.eq.s32.totalorder %s27, 0
      %p332 = por %p330, %p331
      %s333 = ssub.s32 %s28, %s40
      %p334 = scmp.eq.s32.totalorder %s333, 0
      %s336 = sadd.s32 %s335, 1
      %s337 = scalar_select %p334, %s335, %s336
      %p340 = pneg %p334
      %p341 = scmp.eq.s32.totalorder %s21, 3
      %p342 = por %p340, %p341
      %p343 = scmp.ne.s32.totalorder %s335, %s338
      %p344 = scmp.eq.s32.totalorder %s21, 0
      %p345 = por %p343, %p344
      %p346 = scmp.ne.s32.totalorder %s335, %s338
      %p347 = scmp.eq.s32.totalorder %s26, 3
      %p348 = por %p346, %p347
      %p349 = scmp.ne.s32.totalorder %s338, %s339
      %p350 = scmp.eq.s32.totalorder %s26, 0
      %p351 = por %p349, %p350
      %p352 = scmp.ne.s32.totalorder %s338, %s339
      %p353 = scmp.eq.s32.totalorder %s27, 3
      %p354 = por %p352, %p353
      %p356 = scmp.ne.s32.totalorder %s339, %s355
      %p357 = scmp.eq.s32.totalorder %s27, 0
      %p358 = por %p356, %p357
      %p359 = scmp.le.s32.totalorder 1, %s21
      %p360 = scmp.lt.s32.totalorder %s21, 5
      %p361 = pnand %p359, %p360
      %p362 = pneg %p361
      // Predicated region
      $region9: #{tpu_custom_call.1} parent=5 // pred_check
        _
      $region10: #{tpu_custom_call.1} parent=5 // pred_check_branch
        %364 = sbr.rel (%p361) target = $region12
      $region11: #{tpu_custom_call.1} parent=5 // pred_region
        %s365 = ssub.s32 %s21, 1
        // Predicated region
        $region13: #{tpu_custom_call.1} parent=11 // pred_check
          %p366 = pneg %p80
        $region14: #{tpu_custom_call.1} parent=11 // pred_check_branch
          %368 = sbr.rel (%p366) target = $region16
        $region15: #{tpu_custom_call.1} parent=11 // pred_region
          _
        $region16: #{tpu_custom_call.1} parent=11 // pred_fallthru
          _
        // Predicated region
        $region17: #{tpu_custom_call.1} parent=11 // pred_check
          %p369 = pneg %p101
        $region18: #{tpu_custom_call.1} parent=11 // pred_check_branch
          %371 = sbr.rel (%p369) target = $region20
        $region19: #{tpu_custom_call.1} parent=11 // pred_region
          _
        $region20: #{tpu_custom_call.1} parent=11 // pred_fallthru
          _
        // Predicated region
        $region21: #{tpu_custom_call.1} parent=11 // pred_check
          %p372 = pneg %p122
        $region22: #{tpu_custom_call.1} parent=11 // pred_check_branch
          %374 = sbr.rel (%p372) target = $region24
        $region23: #{tpu_custom_call.1} parent=11 // pred_region
          _
        $region24: #{tpu_custom_call.1} parent=11 // pred_fallthru
          _
        // Predicated region
        $region25: #{tpu_custom_call.1} parent=11 // pred_check
          %p375 = pneg %p143
        $region26: #{tpu_custom_call.1} parent=11 // pred_check_branch
          %377 = sbr.rel (%p375) target = $region28
        $region27: #{tpu_custom_call.1} parent=11 // pred_region
          _
        $region28: #{tpu_custom_call.1} parent=11 // pred_fallthru
          _
      $region12: #{tpu_custom_call.1} parent=5 // pred_fallthru
        _
      %p378 = scmp.lt.s32.totalorder %s21, 4
      // Predicated region
      $region29: #{tpu_custom_call.1} parent=5 // pred_check
        %p379 = pneg %p378
      $region30: #{tpu_custom_call.1} parent=5 // pred_check_branch
        %381 = sbr.rel (%p379) target = $region32
      $region31: #{tpu_custom_call.1} parent=5 // pred_region
        // Predicated region
        $region33: #{tpu_custom_call.1} parent=31 // pred_check
          %p382 = pneg %p53
        $region34: #{tpu_custom_call.1} parent=31 // pred_check_branch
          %384 = sbr.rel (%p382) target = $region36
        $region35: #{tpu_custom_call.1} parent=31 // pred_region
          %p385 = scmp.lt.s32.totalorder %s28, 1
          %s386 = scalar_select %p385, %s28, 1
          %s387 = smul.addr %s386, 2
          %s388 = smul.addr %s387, 8
          %s389 = scalar_lea.vmem %s0, %s388
        $region36: #{tpu_custom_call.1} parent=31 // pred_fallthru
          _
        // Predicated region
        $region37: #{tpu_custom_call.1} parent=31 // pred_check
          %p390 = pneg %p163
        $region38: #{tpu_custom_call.1} parent=31 // pred_check_branch
          %392 = sbr.rel (%p390) target = $region40
        $region39: #{tpu_custom_call.1} parent=31 // pred_region
          %p393 = scmp.lt.s32.totalorder %s29, 1
          %s394 = scalar_select %p393, %s29, 1
          %s395 = smul.addr %s394, 4
          %s396 = smul.addr %s395, 4
          %s397 = scalar_lea.vmem %s5, %s396
        $region40: #{tpu_custom_call.1} parent=31 // pred_fallthru
          _
        // Predicated region
        $region41: #{tpu_custom_call.1} parent=31 // pred_check
          %p398 = pneg %p189
        $region42: #{tpu_custom_call.1} parent=31 // pred_check_branch
          %400 = sbr.rel (%p398) target = $region44
        $region43: #{tpu_custom_call.1} parent=31 // pred_region
          %p401 = scmp.lt.s32.totalorder %s29, 1
          %s402 = scalar_select %p401, %s29, 1
          %s403 = smul.addr %s402, 4
          %s404 = smul.addr %s403, 4
          %s405 = scalar_lea.vmem %s6, %s404
        $region44: #{tpu_custom_call.1} parent=31 // pred_fallthru
          _
        // Predicated region
        $region45: #{tpu_custom_call.1} parent=31 // pred_check
          %p406 = pneg %p215
        $region46: #{tpu_custom_call.1} parent=31 // pred_check_branch
          %408 = sbr.rel (%p406) target = $region48
        $region47: #{tpu_custom_call.1} parent=31 // pred_region
          %p409 = scmp.lt.s32.totalorder %s29, 1
          %s410 = scalar_select %p409, %s29, 1
          %s411 = smul.addr %s410, 4
          %s412 = smul.addr %s411, 4
          %s413 = scalar_lea.vmem %s7, %s412
        $region48: #{tpu_custom_call.1} parent=31 // pred_fallthru
          _
        // Predicated region
        $region49: #{tpu_custom_call.1} parent=31 // pred_check
          %p414 = pneg %p241
        $region50: #{tpu_custom_call.1} parent=31 // pred_check_branch
          %416 = sbr.rel (%p414) target = $region52
        $region51: #{tpu_custom_call.1} parent=31 // pred_region
          %p417 = scmp.lt.s32.totalorder %s29, 1
          %s418 = scalar_select %p417, %s29, 1
          %s419 = smul.addr %s418, 16
          %s420 = smul.addr %s419, 4
          %s421 = scalar_lea.vmem %s8, %s420
        $region52: #{tpu_custom_call.1} parent=31 // pred_fallthru
          _
        // Predicated region
        $region53: #{tpu_custom_call.1} parent=31 // pred_check
          %p422 = pneg %p267
        $region54: #{tpu_custom_call.1} parent=31 // pred_check_branch
          %424 = sbr.rel (%p422) target = $region56
        $region55: #{tpu_custom_call.1} parent=31 // pred_region
          %p425 = scmp.lt.s32.totalorder %s29, 1
          %s426 = scalar_select %p425, %s29, 1
          %s427 = smul.addr %s426, 8
          %s428 = scalar_lea.vmem %s9, %s427
        $region56: #{tpu_custom_call.1} parent=31 // pred_fallthru
          _
        // Predicated region
        $region57: #{tpu_custom_call.1} parent=31 // pred_check
          %p429 = pneg %p293
        $region58: #{tpu_custom_call.1} parent=31 // pred_check_branch
          %431 = sbr.rel (%p429) target = $region60
        $region59: #{tpu_custom_call.1} parent=31 // pred_region
          %p432 = scmp.lt.s32.totalorder %s29, 1
          %s433 = scalar_select %p432, %s29, 1
          %s434 = scalar_lea.vmem %s10, %s433
        $region60: #{tpu_custom_call.1} parent=31 // pred_fallthru
          _
        // Predicated region
        $region61: #{tpu_custom_call.1} parent=31 // pred_check
          %p435 = pneg %p319
        $region62: #{tpu_custom_call.1} parent=31 // pred_check_branch
          %437 = sbr.rel (%p435) target = $region64
        $region63: #{tpu_custom_call.1} parent=31 // pred_region
          %p438 = scmp.lt.s32.totalorder %s29, 1
          %s439 = scalar_select %p438, %s29, 1
          %s440 = scalar_lea.vmem %s11, %s439
        $region64: #{tpu_custom_call.1} parent=31 // pred_fallthru
          _
      $region32: #{tpu_custom_call.1} parent=5 // pred_fallthru
        _
      %p441 = scmp.le.s32.totalorder 1, %s21
      %p442 = scmp.lt.s32.totalorder %s21, 5
      %p443 = pnand %p441, %p442
      %p444 = pneg %p443
      // Predicated region
      $region65: #{tpu_custom_call.1} parent=5 // pred_check
        _
      $region66: #{tpu_custom_call.1} parent=5 // pred_check_branch
        %446 = sbr.rel (%p443) target = $region68
      $region67: #{tpu_custom_call.1} parent=5 // pred_region
        %s447 = ssub.s32 %s21, 1
        %p448 = scmp.lt.s32.totalorder %s30, 1
        %s449 = scalar_select %p448, %s30, 1
        %s450 = smul.addr %s449, 2
        %s451 = smul.addr %s450, 8
        %s452 = scalar_lea.vmem %s0, %s451
        %p453 = pneg %p59
        %p454 = pneg %p56
        %p455 = pneg %p80
        %p456 = pneg %p77
        %p457 = pneg %p101
        %p458 = pneg %p98
        %p459 = pneg %p122
        %p460 = pneg %p119
        %p461 = pneg %p143
        %p462 = pneg %p140
        %p463 = scmp.lt.s32.totalorder %s31, 1
        %s464 = scalar_select %p463, %s31, 1
        %s465 = smul.addr %s464, 4
        %s466 = smul.addr %s465, 4
        %s467 = scalar_lea.vmem %s5, %s466
        %p468 = pneg %p169
        %p469 = pneg %p166
        %p470 = scmp.lt.s32.totalorder %s31, 1
        %s471 = scalar_select %p470, %s31, 1
        %s472 = smul.addr %s471, 4
        %s473 = smul.addr %s472, 4
        %s474 = scalar_lea.vmem %s6, %s473
        %p475 = pneg %p195
        %p476 = pneg %p192
        %p477 = scmp.lt.s32.totalorder %s31, 1
        %s478 = scalar_select %p477, %s31, 1
        %s479 = smul.addr %s478, 4
        %s480 = smul.addr %s479, 4
        %s481 = scalar_lea.vmem %s7, %s480
        %p482 = pneg %p221
        %p483 = pneg %p218
        %p484 = scmp.lt.s32.totalorder %s31, 1
        %s485 = scalar_select %p484, %s31, 1
        %s486 = smul.addr %s485, 16
        %s487 = smul.addr %s486, 4
        %s488 = scalar_lea.vmem %s8, %s487
        %p489 = pneg %p247
        %p490 = pneg %p244
        %p491 = scmp.lt.s32.totalorder %s31, 1
        %s492 = scalar_select %p491, %s31, 1
        %s493 = smul.addr %s492, 8
        %s494 = scalar_lea.vmem %s9, %s493
        %p495 = pneg %p273
        %p496 = pneg %p270
        %p497 = scmp.lt.s32.totalorder %s31, 1
        %s498 = scalar_select %p497, %s31, 1
        %s499 = scalar_lea.vmem %s10, %s498
        %p500 = pneg %p299
        %p501 = pneg %p296
        %p502 = scmp.lt.s32.totalorder %s31, 1
        %s503 = scalar_select %p502, %s31, 1
        %s504 = scalar_lea.vmem %s11, %s503
        %p505 = pneg %p325
        %p506 = pneg %p322
        %p507 = pneg %p351
        %p508 = pneg %p348
        %s509 = sand.u32 %s338, 1
        %s510 = scalar_lea.sflag [#allocation4], %s509
        %s511 = sand.u32 %s338, 1
        %s512 = scalar_lea.vmem [#allocation3], %s511
        %p513 = scmp.lt.s32.totalorder %s30, 1
        %s514 = scalar_select %p513, %s30, 1
        %s515 = smul.addr %s514, 2
        %s516 = smul.addr %s515, 8
        %s517 = scalar_lea.vmem %s0, %s516
        %p518 = scmp.lt.s32.totalorder %s31, 1
        %s519 = scalar_select %p518, %s31, 1
        %s520 = smul.addr %s519, 4
        %s521 = smul.addr %s520, 4
        %s522 = scalar_lea.vmem %s5, %s521
        %p523 = scmp.lt.s32.totalorder %s31, 1
        %s524 = scalar_select %p523, %s31, 1
        %s525 = smul.addr %s524, 4
        %s526 = smul.addr %s525, 4
        %s527 = scalar_lea.vmem %s6, %s526
        %p528 = scmp.lt.s32.totalorder %s31, 1
        %s529 = scalar_select %p528, %s31, 1
        %s530 = smul.addr %s529, 4
        %s531 = smul.addr %s530, 4
        %s532 = scalar_lea.vmem %s7, %s531
        %p533 = scmp.lt.s32.totalorder %s31, 1
        %s534 = scalar_select %p533, %s31, 1
        %s535 = smul.addr %s534, 16
        %s536 = smul.addr %s535, 4
        %s537 = scalar_lea.vmem %s8, %s536
        %p538 = scmp.lt.s32.totalorder %s31, 1
        %s539 = scalar_select %p538, %s31, 1
        %s540 = smul.addr %s539, 8
        %s541 = scalar_lea.vmem %s9, %s540
        %p542 = scmp.lt.s32.totalorder %s31, 1
        %s543 = scalar_select %p542, %s31, 1
        %s544 = scalar_lea.vmem %s10, %s543
        %p545 = scmp.lt.s32.totalorder %s31, 1
        %s546 = scalar_select %p545, %s31, 1
        %s547 = scalar_lea.vmem %s11, %s546
        %p550 = scmp.eq.s32.totalorder %s31, 0
        // Predicated region
        $region69: #{tpu_custom_call.1} parent=67 // pred_check
          %p551 = pneg %p550
        $region70: #{tpu_custom_call.1} parent=67 // pred_check_branch
          %553 = sbr.rel (%p551) target = $region72
        $region71: #{tpu_custom_call.1} parent=67 // pred_region
          %v554 = vld [vmem:[%s517] sm:$0xff]
          %v555 = vld [vmem:[%s517 + $0x8] sm:$0xff]
          %v556 = vpack.c.bf16 %v555, %v554
          %v557 = vld [vmem:[%s1] sm:$0x1]
          %v558 = vld [vmem:[%s2] sm:$0x1]
          %v559 = vlaneseq
          %v560 = vshrl.u32 %v559, 7
          %v561 = vsub.s32 0, %v560
          %v562 = vrot.slane %v558, %v561
          %vm563 = vcmask 15360
          %v565 = vsel %vm563, %v556, 0
          %vm567 = vcmask 1040384
          %v569 = vsel %vm567, %v557, 0
          %571 = vmatprep.subr.bf16.mxu0 0
          %572 = vmatpush1.bf16.msra.mxu0 0
          %573 = vmatprep.subr.bf16.mxu0 0
          %574 = vmatpush1.bf16.msra.mxu0 0
          %575 = vmatprep.subr.bf16.mxu0 0
          %576 = vmatpush1.bf16.msra.mxu0 0
          %577 = vmatprep.subr.bf16.mxu0 0
          %578 = vmatpush1.bf16.msra.mxu0 0
          %579 = vmatprep.subr.bf16.mxu0 0
          %580 = vmatpush1.bf16.msra.mxu0 0
          %581 = vmatprep.subr.bf16.mxu0 0
          %582 = vmatpush1.bf16.msra.mxu0 0
          %583 = vmatprep.subr.bf16.mxu0 0
          %584 = vmatpush1.bf16.msra.mxu0 0
          %585 = vmatprep.subr.bf16.mxu0 0
          %586 = vmatpush1.bf16.msra.mxu0 %v569
          %587 = vmatprep.subr.bf16.mxu0 0
          %588 = vmatpush2.bf16.msra.mxu0 0
          %589 = vmatprep.subr.bf16.mxu0 0
          %590 = vmatpush2.bf16.msra.mxu0 0
          %591 = vmatprep.subr.bf16.mxu0 0
          %592 = vmatpush2.bf16.msra.mxu0 0
          %593 = vmatprep.subr.bf16.mxu0 0
          %594 = vmatpush2.bf16.msra.mxu0 0
          %595 = vmatprep.subr.bf16.mxu0 0
          %596 = vmatpush2.bf16.msra.mxu0 0
          %597 = vmatprep.subr.bf16.mxu0 0
          %598 = vmatpush2.bf16.msra.mxu0 0
          %599 = vmatprep.subr.bf16.mxu0 0
          %600 = vmatpush2.bf16.msra.mxu0 0
          %601 = vmatprep.subr.bf16.mxu0 0
          %602 = vmatpush2.bf16.msra.mxu0 0
          %603 = vmatprep.mubr.bf16.mxu0 0
          %604 = vmatmul.mubr.bf16.gmra.mxu0 %v565
          %v605 = vpop.f32.mrf.mxu0
          %v606 = vadd.f32 %v562, %v605
          %v607 = vpop.f32.mrf.mxu0
          %v608 = vpop.f32.mrf.mxu0
          %v609 = vadd.f32 %v562, %v608
          %v610 = vpop.f32.mrf.mxu0
          %611 = vdwg.mxu0
          %vm612 = vcmask 261120
          %613 = vst.msk [vmem:[#allocation2] sm:$0xff] %vm612, %v606
          %614 = vst.msk [vmem:[#allocation2 + $0x8] sm:$0xff] %vm612, %v609
        $region72: #{tpu_custom_call.1} parent=67 // pred_fallthru
          _
        %v615 = vld [vmem:[#allocation2] sm:$0xff]
        %v616 = vld [vmem:[#allocation2 + $0x8] sm:$0xff]
        %v617 = vld [vmem:[%s541] sm:$0x1]
        %v618 = vld [vmem:[%s541 + $0x1] sm:$0x1]
        %v619 = vld [vmem:[%s541 + $0x2] sm:$0x1]
        %v620 = vld [vmem:[%s541 + $0x3] sm:$0x1]
        %v621 = vld [vmem:[%s541 + $0x4] sm:$0x1]
        %v622 = vld [vmem:[%s541 + $0x5] sm:$0x1]
        %vm623 = vcmask 261120
        %v624 = vsel %vm623, %v615, 0.0
        %625 = vadd.xlane.f32.xlu0 %v624
        %v626 = vpop.xlane.xlu0 %625
        %v627 = vsel %vm623, %v616, 0.0
        %628 = vadd.xlane.f32.xlu0 %v627
        %v629 = vpop.xlane.xlu0 %628
        %v630 = vrcp.pop 32.0
        %v631 = vmul.f32 %v626, %v630
        %v632 = vmul.f32 %v629, %v630
        %v633 = vsub.f32 %v615, %v631
        %v634 = vsub.f32 %v616, %v632
        %v635 = vmul.f32 %v633, %v633
        %v636 = vmul.f32 %v634, %v634
        %v637 = vsel %vm623, %v635, 0.0
        %638 = vadd.xlane.f32.xlu0 %v637
        %v639 = vpop.xlane.xlu0 %638
        %v640 = vsel %vm623, %v636, 0.0
        %641 = vadd.xlane.f32.xlu0 %v640
        %v642 = vpop.xlane.xlu0 %641
        %v643 = vmul.f32 %v639, %v630
        %v644 = vmul.f32 %v642, %v630
        %v645 = vadd.f32 %v643, 1e-05
        %v646 = vadd.f32 %v644, 1e-05
        %v647 = vrsqrt.pop %v645
        %v648 = vrsqrt.pop %v646
        %v649 = vmul.f32 %v633, %v647
        %v650 = vmul.f32 %v634, %v648
        %v651 = vlaneseq
        %v652 = vshrl.u32 %v651, 7
        %v653 = vsub.s32 0, %v652
        %v654 = vrot.slane %v617, %v653
        %v655 = vmul.f32 %v649, %v654
        %v656 = vmul.f32 %v650, %v654
        %v657 = vlaneseq
        %v658 = vshrl.u32 %v657, 7
        %v659 = vsub.s32 0, %v658
        %v660 = vrot.slane %v618, %v659
        %v661 = vadd.f32 %v655, %v660
        %v662 = vadd.f32 %v656, %v660
        %v663 = vpack.c.bf16 %v662, %v661
        %v664 = vld [vmem:[%s522] sm:$0xf]
        %v665 = vld [vmem:[%s522 + $0x4] sm:$0xf]
        %v666 = vld [vmem:[%s522 + $0x8] sm:$0xf]
        %v667 = vld [vmem:[%s522 + $0xc] sm:$0xf]
        %v668 = vld [vmem:[%s544] sm:$0x1]
        %v670 = vlaneseq
        %v671 = vshrl.u32 %v670, 7
        %v672 = vsub.s32 0, %v671
        %v673 = vrot.slane %v668, %v672
        %v679 = vunpack.c.l.b16 %v664
        %v680 = vunpack.c.l.b16 %v665
        %v681 = vunpack.c.l.b16 %v666
        %v682 = vunpack.c.l.b16 %v667
        %v683 = vpack.c.b16 %v680, %v679
        %v684 = vpack.c.b16 %v682, %v681
        %v688 = vsel %vm623, %v663, 0
        %690 = vmatprep.subr.bf16.mxu0 0
        %691 = vmatpush1.bf16.msra.mxu0 0
        %692 = vmatprep.subr.bf16.mxu0 0
        %693 = vmatpush1.bf16.msra.mxu0 0
        %694 = vmatprep.subr.bf16.mxu0 0
        %695 = vmatpush1.bf16.msra.mxu0 0
        %696 = vmatprep.subr.bf16.mxu0 0
        %697 = vmatpush1.bf16.msra.mxu0 0
        %698 = vmatprep.subr.bf16.mxu0 0
        %699 = vmatpush1.bf16.msra.mxu0 0
        %700 = vmatprep.subr.bf16.mxu0 0
        %701 = vmatpush1.bf16.msra.mxu0 0
        %702 = vmatprep.subr.bf16.mxu0 0
        %703 = vmatpush1.bf16.msra.mxu0 %v684
        %704 = vmatprep.subr.bf16.mxu0 0
        %705 = vmatpush1.bf16.msra.mxu0 %v683
        %706 = vmatprep.subr.bf16.mxu0 0
        %707 = vmatpush2.bf16.msra.mxu0 0
        %708 = vmatprep.subr.bf16.mxu0 0
        %709 = vmatpush2.bf16.msra.mxu0 0
        %710 = vmatprep.subr.bf16.mxu0 0
        %711 = vmatpush2.bf16.msra.mxu0 0
        %712 = vmatprep.subr.bf16.mxu0 0
        %713 = vmatpush2.bf16.msra.mxu0 0
        %714 = vmatprep.subr.bf16.mxu0 0
        %715 = vmatpush2.bf16.msra.mxu0 0
        %716 = vmatprep.subr.bf16.mxu0 0
        %717 = vmatpush2.bf16.msra.mxu0 0
        %718 = vmatprep.subr.bf16.mxu0 0
        %719 = vmatpush2.bf16.msra.mxu0 0
        %720 = vmatprep.subr.bf16.mxu0 0
        %721 = vmatpush2.bf16.msra.mxu0 0
        %722 = vmatprep.mubr.bf16.mxu0 0
        %723 = vmatmul.mubr.bf16.gmra.mxu0 %v688
        %v724 = vpop.f32.mrf.mxu0
        %v725 = vadd.f32 %v673, %v724
        %v726 = vpop.f32.mrf.mxu0
        %v727 = vpop.f32.mrf.mxu0
        %v728 = vadd.f32 %v673, %v727
        %v729 = vpop.f32.mrf.mxu0
        %730 = vdwg.mxu0
        %v731 = vpack.c.bf16 %v728, %v725
        %733 = vrot.lane.b32.xlu0 %v731, 96
        %v734 = vpop.permute.xlu0 %733
        %vm735 = vcmask 64512
        %v737 = vsel %vm735, %v731, 0
        %v740 = vsel %vm735, %v734, 0
        %742 = vmatprep.subr.bf16.mxu0 0
        %743 = vmatpush1.bf16.xpose.msra.mxu0 0
        %744 = vmatprep.subr.bf16.mxu0 0
        %745 = vmatpush1.bf16.xpose.msra.mxu0 0
        %746 = vmatprep.subr.bf16.mxu0 0
        %747 = vmatpush1.bf16.xpose.msra.mxu0 0
        %748 = vmatprep.subr.bf16.mxu0 0
        %749 = vmatpush1.bf16.xpose.msra.mxu0 0
        %750 = vmatprep.subr.bf16.mxu0 0
        %751 = vmatpush1.bf16.xpose.msra.mxu0 0
        %752 = vmatprep.subr.bf16.mxu0 0
        %753 = vmatpush1.bf16.xpose.msra.mxu0 0
        %754 = vmatprep.subr.bf16.mxu0 0
        %755 = vmatpush1.bf16.xpose.msra.mxu0 0
        %756 = vmatprep.subr.bf16.mxu0 0
        %757 = vmatpush1.bf16.xpose.msra.mxu0 %v740
        %758 = vmatprep.subr.bf16.mxu0 0
        %759 = vmatpush2.bf16.xpose.msra.mxu0 0
        %760 = vmatprep.subr.bf16.mxu0 0
        %761 = vmatpush2.bf16.xpose.msra.mxu0 0
        %762 = vmatprep.subr.bf16.mxu0 0
        %763 = vmatpush2.bf16.xpose.msra.mxu0 0
        %764 = vmatprep.subr.bf16.mxu0 0
        %765 = vmatpush2.bf16.xpose.msra.mxu0 0
        %766 = vmatprep.subr.bf16.mxu0 0
        %767 = vmatpush2.bf16.xpose.msra.mxu0 0
        %768 = vmatprep.subr.bf16.mxu0 0
        %769 = vmatpush2.bf16.xpose.msra.mxu0 0
        %770 = vmatprep.subr.bf16.mxu0 0
        %771 = vmatpush2.bf16.xpose.msra.mxu0 0
        %772 = vmatprep.subr.bf16.mxu0 0
        %773 = vmatpush2.bf16.xpose.msra.mxu0 0
        %774 = vmatprep.mubr.bf16.mxu0 0
        %775 = vmatmul.mubr.bf16.gmra.mxu0 %v737
        %v776 = vpop.f32.mrf.mxu0
        %v777 = vadd.f32 0.0, %v776
        %v778 = vpop.f32.mrf.mxu0
        %v779 = vpop.f32.mrf.mxu0
        %v780 = vadd.f32 0.0, %v779
        %v781 = vpop.f32.mrf.mxu0
        %782 = vdwg.mxu0
        %vm783 = vcmask 130048
        %v784 = vsel %vm783, %v777, -inf
        %785 = vmax.xlane.f32.xlu0 %v784
        %v786 = vpop.xlane.xlu0 %785
        %v787 = vsel %vm783, %v780, -inf
        %788 = vmax.xlane.f32.xlu0 %v787
        %v789 = vpop.xlane.xlu0 %788
        %v790 = vsub.f32 %v777, %v786
        %v791 = vsub.f32 %v780, %v789
        %v792 = vmul.f32 %v790, 1.442695
        %v793 = vpow.pop %v792
        %v794 = vmul.f32 %v791, 1.442695
        %v795 = vpow.pop %v794
        %v796 = vsel %vm783, %v793, 0.0
        %797 = vadd.xlane.f32.xlu0 %v796
        %v798 = vpop.xlane.xlu0 %797
        %v799 = vsel %vm783, %v795, 0.0
        %800 = vadd.xlane.f32.xlu0 %v799
        %v801 = vpop.xlane.xlu0 %800
        %v802 = vrcp.pop %v798
        %v803 = vrcp.pop %v801
        %v804 = vmul.f32 %v798, %v802
        %v805 = vmul.f32 %v801, %v803
        %v806 = vsub.f32 2.0, %v804
        %v807 = vsub.f32 2.0, %v805
        %v808 = vmul.f32 %v802, %v806
        %v809 = vmul.f32 %v803, %v807
        %v810 = vmul.f32 %v793, %v808
        %v811 = vmul.f32 %v795, %v809
        %v812 = vpack.c.bf16 %v811, %v810
        %813 = vrot.lane.b32.xlu0 %v731, 64
        %v814 = vpop.permute.xlu0 %813
        %v817 = vsel %vm783, %v812, 0
        %819 = vmatprep.subr.bf16.mxu0 0
        %820 = vmatpush1.bf16.msra.mxu0 0
        %821 = vmatprep.subr.bf16.mxu0 0
        %822 = vmatpush1.bf16.msra.mxu0 0
        %823 = vmatprep.subr.bf16.mxu0 0
        %824 = vmatpush1.bf16.msra.mxu0 0
        %825 = vmatprep.subr.bf16.mxu0 0
        %826 = vmatpush1.bf16.msra.mxu0 0
        %827 = vmatprep.subr.bf16.mxu0 0
        %828 = vmatpush1.bf16.msra.mxu0 0
        %829 = vmatprep.subr.bf16.mxu0 0
        %830 = vmatpush1.bf16.msra.mxu0 0
        %831 = vmatprep.subr.bf16.mxu0 0
        %832 = vmatpush1.bf16.msra.mxu0 0
        %833 = vmatprep.subr.bf16.mxu0 0
        %834 = vmatpush1.bf16.msra.mxu0 %v814
        %835 = vmatprep.subr.bf16.mxu0 0
        %836 = vmatpush2.bf16.msra.mxu0 0
        %837 = vmatprep.subr.bf16.mxu0 0
        %838 = vmatpush2.bf16.msra.mxu0 0
        %839 = vmatprep.subr.bf16.mxu0 0
        %840 = vmatpush2.bf16.msra.mxu0 0
        %841 = vmatprep.subr.bf16.mxu0 0
        %842 = vmatpush2.bf16.msra.mxu0 0
        %843 = vmatprep.subr.bf16.mxu0 0
        %844 = vmatpush2.bf16.msra.mxu0 0
        %845 = vmatprep.subr.bf16.mxu0 0
        %846 = vmatpush2.bf16.msra.mxu0 0
        %847 = vmatprep.subr.bf16.mxu0 0
        %848 = vmatpush2.bf16.msra.mxu0 0
        %849 = vmatprep.subr.bf16.mxu0 0
        %850 = vmatpush2.bf16.msra.mxu0 0
        %851 = vmatprep.mubr.bf16.mxu0 0
        %852 = vmatmul.mubr.bf16.gmra.mxu0 %v817
        %v853 = vpop.f32.mrf.mxu0
        %v854 = vadd.f32 0.0, %v853
        %v855 = vpop.f32.mrf.mxu0
        %v856 = vpop.f32.mrf.mxu0
        %v857 = vadd.f32 0.0, %v856
        %v858 = vpop.f32.mrf.mxu0
        %859 = vdwg.mxu0
        %860 = vrot.lane.b32.xlu0 %v731, 120
        %v861 = vpop.permute.xlu0 %860
        %862 = vrot.lane.b32.xlu0 %v731, 88
        %v863 = vpop.permute.xlu0 %862
        %v865 = vsel %vm735, %v861, 0
        %v868 = vsel %vm735, %v863, 0
        %870 = vmatprep.subr.bf16.mxu0 0
        %871 = vmatpush1.bf16.xpose.msra.mxu0 0
        %872 = vmatprep.subr.bf16.mxu0 0
        %873 = vmatpush1.bf16.xpose.msra.mxu0 0
        %874 = vmatprep.subr.bf16.mxu0 0
        %875 = vmatpush1.bf16.xpose.msra.mxu0 0
        %876 = vmatprep.subr.bf16.mxu0 0
        %877 = vmatpush1.bf16.xpose.msra.mxu0 0
        %878 = vmatprep.subr.bf16.mxu0 0
        %879 = vmatpush1.bf16.xpose.msra.mxu0 0
        %880 = vmatprep.subr.bf16.mxu0 0
        %881 = vmatpush1.bf16.xpose.msra.mxu0 0
        %882 = vmatprep.subr.bf16.mxu0 0
        %883 = vmatpush1.bf16.xpose.msra.mxu0 0
        %884 = vmatprep.subr.bf16.mxu0 0
        %885 = vmatpush1.bf16.xpose.msra.mxu0 %v868
        %886 = vmatprep.subr.bf16.mxu0 0
        %887 = vmatpush2.bf16.xpose.msra.mxu0 0
        %888 = vmatprep.subr.bf16.mxu0 0
        %889 = vmatpush2.bf16.xpose.msra.mxu0 0
        %890 = vmatprep.subr.bf16.mxu0 0
        %891 = vmatpush2.bf16.xpose.msra.mxu0 0
        %892 = vmatprep.subr.bf16.mxu0 0
        %893 = vmatpush2.bf16.xpose.msra.mxu0 0
        %894 = vmatprep.subr.bf16.mxu0 0
        %895 = vmatpush2.bf16.xpose.msra.mxu0 0
        %896 = vmatprep.subr.bf16.mxu0 0
        %897 = vmatpush2.bf16.xpose.msra.mxu0 0
        %898 = vmatprep.subr.bf16.mxu0 0
        %899 = vmatpush2.bf16.xpose.msra.mxu0 0
        %900 = vmatprep.subr.bf16.mxu0 0
        %901 = vmatpush2.bf16.xpose.msra.mxu0 0
        %902 = vmatprep.mubr.bf16.mxu0 0
        %903 = vmatmul.mubr.bf16.gmra.mxu0 %v865
        %v904 = vpop.f32.mrf.mxu0
        %v905 = vadd.f32 0.0, %v904
        %v906 = vpop.f32.mrf.mxu0
        %v907 = vpop.f32.mrf.mxu0
        %v908 = vadd.f32 0.0, %v907
        %v909 = vpop.f32.mrf.mxu0
        %910 = vdwg.mxu0
        %v911 = vsel %vm783, %v905, -inf
        %912 = vmax.xlane.f32.xlu0 %v911
        %v913 = vpop.xlane.xlu0 %912
        %v914 = vsel %vm783, %v908, -inf
        %915 = vmax.xlane.f32.xlu0 %v914
        %v916 = vpop.xlane.xlu0 %915
        %v917 = vsub.f32 %v905, %v913
        %v918 = vsub.f32 %v908, %v916
        %v919 = vmul.f32 %v917, 1.442695
        %v920 = vpow.pop %v919
        %v921 = vmul.f32 %v918, 1.442695
        %v922 = vpow.pop %v921
        %v923 = vsel %vm783, %v920, 0.0
        %924 = vadd.xlane.f32.xlu0 %v923
        %v925 = vpop.xlane.xlu0 %924
        %v926 = vsel %vm783, %v922, 0.0
        %927 = vadd.xlane.f32.xlu0 %v926
        %v928 = vpop.xlane.xlu0 %927
        %v929 = vrcp.pop %v925
        %v930 = vrcp.pop %v928
        %v931 = vmul.f32 %v925, %v929
        %v932 = vmul.f32 %v928, %v930
        %v933 = vsub.f32 2.0, %v931
        %v934 = vsub.f32 2.0, %v932
        %v935 = vmul.f32 %v929, %v933
        %v936 = vmul.f32 %v930, %v934
        %v937 = vmul.f32 %v920, %v935
        %v938 = vmul.f32 %v922, %v936
        %v939 = vpack.c.bf16 %v938, %v937
        %940 = vrot.lane.b32.xlu0 %v731, 56
        %v941 = vpop.permute.xlu0 %940
        %v944 = vsel %vm783, %v939, 0
        %946 = vmatprep.subr.bf16.mxu0 0
        %947 = vmatpush1.bf16.msra.mxu0 0
        %948 = vmatprep.subr.bf16.mxu0 0
        %949 = vmatpush1.bf16.msra.mxu0 0
        %950 = vmatprep.subr.bf16.mxu0 0
        %951 = vmatpush1.bf16.msra.mxu0 0
        %952 = vmatprep.subr.bf16.mxu0 0
        %953 = vmatpush1.bf16.msra.mxu0 0
        %954 = vmatprep.subr.bf16.mxu0 0
        %955 = vmatpush1.bf16.msra.mxu0 0
        %956 = vmatprep.subr.bf16.mxu0 0
        %957 = vmatpush1.bf16.msra.mxu0 0
        %958 = vmatprep.subr.bf16.mxu0 0
        %959 = vmatpush1.bf16.msra.mxu0 0
        %960 = vmatprep.subr.bf16.mxu0 0
        %961 = vmatpush1.bf16.msra.mxu0 %v941
        %962 = vmatprep.subr.bf16.mxu0 0
        %963 = vmatpush2.bf16.msra.mxu0 0
        %964 = vmatprep.subr.bf16.mxu0 0
        %965 = vmatpush2.bf16.msra.mxu0 0
        %966 = vmatprep.subr.bf16.mxu0 0
        %967 = vmatpush2.bf16.msra.mxu0 0
        %968 = vmatprep.subr.bf16.mxu0 0
        %969 = vmatpush2.bf16.msra.mxu0 0
        %970 = vmatprep.subr.bf16.mxu0 0
        %971 = vmatpush2.bf16.msra.mxu0 0
        %972 = vmatprep.subr.bf16.mxu0 0
        %973 = vmatpush2.bf16.msra.mxu0 0
        %974 = vmatprep.subr.bf16.mxu0 0
        %975 = vmatpush2.bf16.msra.mxu0 0
        %976 = vmatprep.subr.bf16.mxu0 0
        %977 = vmatpush2.bf16.msra.mxu0 0
        %978 = vmatprep.mubr.bf16.mxu0 0
        %979 = vmatmul.mubr.bf16.gmra.mxu0 %v944
        %v980 = vpop.f32.mrf.mxu0
        %v981 = vadd.f32 0.0, %v980
        %v982 = vpop.f32.mrf.mxu0
        %v983 = vpop.f32.mrf.mxu0
        %v984 = vadd.f32 0.0, %v983
        %v985 = vpop.f32.mrf.mxu0
        %986 = vdwg.mxu0
        %987 = vrot.lane.b32.xlu0 %v731, 112
        %v988 = vpop.permute.xlu0 %987
        %989 = vrot.lane.b32.xlu0 %v731, 80
        %v990 = vpop.permute.xlu0 %989
        %v992 = vsel %vm735, %v988, 0
        %v995 = vsel %vm735, %v990, 0
        %997 = vmatprep.subr.bf16.mxu0 0
        %998 = vmatpush1.bf16.xpose.msra.mxu0 0
        %999 = vmatprep.subr.bf16.mxu0 0
        %1000 = vmatpush1.bf16.xpose.msra.mxu0 0
        %1001 = vmatprep.subr.bf16.mxu0 0
        %1002 = vmatpush1.bf16.xpose.msra.mxu0 0
        %1003 = vmatprep.subr.bf16.mxu0 0
        %1004 = vmatpush1.bf16.xpose.msra.mxu0 0
        %1005 = vmatprep.subr.bf16.mxu0 0
        %1006 = vmatpush1.bf16.xpose.msra.mxu0 0
        %1007 = vmatprep.subr.bf16.mxu0 0
        %1008 = vmatpush1.bf16.xpose.msra.mxu0 0
        %1009 = vmatprep.subr.bf16.mxu0 0
        %1010 = vmatpush1.bf16.xpose.msra.mxu0 0
        %1011 = vmatprep.subr.bf16.mxu0 0
        %1012 = vmatpush1.bf16.xpose.msra.mxu0 %v995
        %1013 = vmatprep.subr.bf16.mxu0 0
        %1014 = vmatpush2.bf16.xpose.msra.mxu0 0
        %1015 = vmatprep.subr.bf16.mxu0 0
        %1016 = vmatpush2.bf16.xpose.msra.mxu0 0
        %1017 = vmatprep.subr.bf16.mxu0 0
        %1018 = vmatpush2.bf16.xpose.msra.mxu0 0
        %1019 = vmatprep.subr.bf16.mxu0 0
        %1020 = vmatpush2.bf16.xpose.msra.mxu0 0
        %1021 = vmatprep.subr.bf16.mxu0 0
        %1022 = vmatpush2.bf16.xpose.msra.mxu0 0
        %1023 = vmatprep.subr.bf16.mxu0 0
        %1024 = vmatpush2.bf16.xpose.msra.mxu0 0
        %1025 = vmatprep.subr.bf16.mxu0 0
        %1026 = vmatpush2.bf16.xpose.msra.mxu0 0
        %1027 = vmatprep.subr.bf16.mxu0 0
        %1028 = vmatpush2.bf16.xpose.msra.mxu0 0
        %1029 = vmatprep.mubr.bf16.mxu0 0
        %1030 = vmatmul.mubr.bf16.gmra.mxu0 %v992
        %v1031 = vpop.f32.mrf.mxu0
        %v1032 = vadd.f32 0.0, %v1031
        %v1033 = vpop.f32.mrf.mxu0
        %v1034 = vpop.f32.mrf.mxu0
        %v1035 = vadd.f32 0.0, %v1034
        %v1036 = vpop.f32.mrf.mxu0
        %1037 = vdwg.mxu0
        %v1038 = vsel %vm783, %v1032, -inf
        %1039 = vmax.xlane.f32.xlu0 %v1038
        %v1040 = vpop.xlane.xlu0 %1039
        %v1041 = vsel %vm783, %v1035, -inf
        %1042 = vmax.xlane.f32.xlu0 %v1041
        %v1043 = vpop.xlane.xlu0 %1042
        %v1044 = vsub.f32 %v1032, %v1040
        %v1045 = vsub.f32 %v1035, %v1043
        %v1046 = vmul.f32 %v1044, 1.442695
        %v1047 = vpow.pop %v1046
        %v1048 = vmul.f32 %v1045, 1.442695
        %v1049 = vpow.pop %v1048
        %v1050 = vsel %vm783, %v1047, 0.0
        %1051 = vadd.xlane.f32.xlu0 %v1050
        %v1052 = vpop.xlane.xlu0 %1051
        %v1053 = vsel %vm783, %v1049, 0.0
        %1054 = vadd.xlane.f32.xlu0 %v1053
        %v1055 = vpop.xlane.xlu0 %1054
        %v1056 = vrcp.pop %v1052
        %v1057 = vrcp.pop %v1055
        %v1058 = vmul.f32 %v1052, %v1056
        %v1059 = vmul.f32 %v1055, %v1057
        %v1060 = vsub.f32 2.0, %v1058
        %v1061 = vsub.f32 2.0, %v1059
        %v1062 = vmul.f32 %v1056, %v1060
        %v1063 = vmul.f32 %v1057, %v1061
        %v1064 = vmul.f32 %v1047, %v1062
        %v1065 = vmul.f32 %v1049, %v1063
        %v1066 = vpack.c.bf16 %v1065, %v1064
        %1067 = vrot.lane.b32.xlu0 %v731, 48
        %v1068 = vpop.permute.xlu0 %1067
        %v1071 = vsel %vm783, %v1066, 0
        %1073 = vmatprep.subr.bf16.mxu0 0
        %1074 = vmatpush1.bf16.msra.mxu0 0
        %1075 = vmatprep.subr.bf16.mxu0 0
        %1076 = vmatpush1.bf16.msra.mxu0 0
        %1077 = vmatprep.subr.bf16.mxu0 0
        %1078 = vmatpush1.bf16.msra.mxu0 0
        %1079 = vmatprep.subr.bf16.mxu0 0
        %1080 = vmatpush1.bf16.msra.mxu0 0
        %1081 = vmatprep.subr.bf16.mxu0 0
        %1082 = vmatpush1.bf16.msra.mxu0 0
        %1083 = vmatprep.subr.bf16.mxu0 0
        %1084 = vmatpush1.bf16.msra.mxu0 0
        %1085 = vmatprep.subr.bf16.mxu0 0
        %1086 = vmatpush1.bf16.msra.mxu0 0
        %1087 = vmatprep.subr.bf16.mxu0 0
        %1088 = vmatpush1.bf16.msra.mxu0 %v1068
        %1089 = vmatprep.subr.bf16.mxu0 0
        %1090 = vmatpush2.bf16.msra.mxu0 0
        %1091 = vmatprep.subr.bf16.mxu0 0
        %1092 = vmatpush2.bf16.msra.mxu0 0
        %1093 = vmatprep.subr.bf16.mxu0 0
        %1094 = vmatpush2.bf16.msra.mxu0 0
        %1095 = vmatprep.subr.bf16.mxu0 0
        %1096 = vmatpush2.bf16.msra.mxu0 0
        %1097 = vmatprep.subr.bf16.mxu0 0
        %1098 = vmatpush2.bf16.msra.mxu0 0
        %1099 = vmatprep.subr.bf16.mxu0 0
        %1100 = vmatpush2.bf16.msra.mxu0 0
        %1101 = vmatprep.subr.bf16.mxu0 0
        %1102 = vmatpush2.bf16.msra.mxu0 0
        %1103 = vmatprep.subr.bf16.mxu0 0
        %1104 = vmatpush2.bf16.msra.mxu0 0
        %1105 = vmatprep.mubr.bf16.mxu0 0
        %1106 = vmatmul.mubr.bf16.gmra.mxu0 %v1071
        %v1107 = vpop.f32.mrf.mxu0
        %v1108 = vadd.f32 0.0, %v1107
        %v1109 = vpop.f32.mrf.mxu0
        %v1110 = vpop.f32.mrf.mxu0
        %v1111 = vadd.f32 0.0, %v1110
        %v1112 = vpop.f32.mrf.mxu0
        %1113 = vdwg.mxu0
        %1114 = vrot.lane.b32.xlu0 %v731, 104
        %v1115 = vpop.permute.xlu0 %1114
        %1116 = vrot.lane.b32.xlu0 %v731, 72
        %v1117 = vpop.permute.xlu0 %1116
        %v1119 = vsel %vm735, %v1115, 0
        %v1122 = vsel %vm735, %v1117, 0
        %1124 = vmatprep.subr.bf16.mxu0 0
        %1125 = vmatpush1.bf16.xpose.msra.mxu0 0
        %1126 = vmatprep.subr.bf16.mxu0 0
        %1127 = vmatpush1.bf16.xpose.msra.mxu0 0
        %1128 = vmatprep.subr.bf16.mxu0 0
        %1129 = vmatpush1.bf16.xpose.msra.mxu0 0
        %1130 = vmatprep.subr.bf16.mxu0 0
        %1131 = vmatpush1.bf16.xpose.msra.mxu0 0
        %1132 = vmatprep.subr.bf16.mxu0 0
        %1133 = vmatpush1.bf16.xpose.msra.mxu0 0
        %1134 = vmatprep.subr.bf16.mxu0 0
        %1135 = vmatpush1.bf16.xpose.msra.mxu0 0
        %1136 = vmatprep.subr.bf16.mxu0 0
        %1137 = vmatpush1.bf16.xpose.msra.mxu0 0
        %1138 = vmatprep.subr.bf16.mxu0 0
        %1139 = vmatpush1.bf16.xpose.msra.mxu0 %v1122
        %1140 = vmatprep.subr.bf16.mxu0 0
        %1141 = vmatpush2.bf16.xpose.msra.mxu0 0
        %1142 = vmatprep.subr.bf16.mxu0 0
        %1143 = vmatpush2.bf16.xpose.msra.mxu0 0
        %1144 = vmatprep.subr.bf16.mxu0 0
        %1145 = vmatpush2.bf16.xpose.msra.mxu0 0
        %1146 = vmatprep.subr.bf16.mxu0 0
        %1147 = vmatpush2.bf16.xpose.msra.mxu0 0
        %1148 = vmatprep.subr.bf16.mxu0 0
        %1149 = vmatpush2.bf16.xpose.msra.mxu0 0
        %1150 = vmatprep.subr.bf16.mxu0 0
        %1151 = vmatpush2.bf16.xpose.msra.mxu0 0
        %1152 = vmatprep.subr.bf16.mxu0 0
        %1153 = vmatpush2.bf16.xpose.msra.mxu0 0
        %1154 = vmatprep.subr.bf16.mxu0 0
        %1155 = vmatpush2.bf16.xpose.msra.mxu0 0
        %1156 = vmatprep.mubr.bf16.mxu0 0
        %1157 = vmatmul.mubr.bf16.gmra.mxu0 %v1119
        %v1158 = vpop.f32.mrf.mxu0
        %v1159 = vadd.f32 0.0, %v1158
        %v1160 = vpop.f32.mrf.mxu0
        %v1161 = vpop.f32.mrf.mxu0
        %v1162 = vadd.f32 0.0, %v1161
        %v1163 = vpop.f32.mrf.mxu0
        %1164 = vdwg.mxu0
        %v1165 = vsel %vm783, %v1159, -inf
        %1166 = vmax.xlane.f32.xlu0 %v1165
        %v1167 = vpop.xlane.xlu0 %1166
        %v1168 = vsel %vm783, %v1162, -inf
        %1169 = vmax.xlane.f32.xlu0 %v1168
        %v1170 = vpop.xlane.xlu0 %1169
        %v1171 = vsub.f32 %v1159, %v1167
        %v1172 = vsub.f32 %v1162, %v1170
        %v1173 = vmul.f32 %v1171, 1.442695
        %v1174 = vpow.pop %v1173
        %v1175 = vmul.f32 %v1172, 1.442695
        %v1176 = vpow.pop %v1175
        %v1177 = vsel %vm783, %v1174, 0.0
        %1178 = vadd.xlane.f32.xlu0 %v1177
        %v1179 = vpop.xlane.xlu0 %1178
        %v1180 = vsel %vm783, %v1176, 0.0
        %1181 = vadd.xlane.f32.xlu0 %v1180
        %v1182 = vpop.xlane.xlu0 %1181
        %v1183 = vrcp.pop %v1179
        %v1184 = vrcp.pop %v1182
        %v1185 = vmul.f32 %v1179, %v1183
        %v1186 = vmul.f32 %v1182, %v1184
        %v1187 = vsub.f32 2.0, %v1185
        %v1188 = vsub.f32 2.0, %v1186
        %v1189 = vmul.f32 %v1183, %v1187
        %v1190 = vmul.f32 %v1184, %v1188
        %v1191 = vmul.f32 %v1174, %v1189
        %v1192 = vmul.f32 %v1176, %v1190
        %v1193 = vpack.c.bf16 %v1192, %v1191
        %1194 = vrot.lane.b32.xlu0 %v731, 40
        %v1195 = vpop.permute.xlu0 %1194
        %v1198 = vsel %vm783, %v1193, 0
        %1200 = vmatprep.subr.bf16.mxu0 0
        %1201 = vmatpush1.bf16.msra.mxu0 0
        %1202 = vmatprep.subr.bf16.mxu0 0
        %1203 = vmatpush1.bf16.msra.mxu0 0
        %1204 = vmatprep.subr.bf16.mxu0 0
        %1205 = vmatpush1.bf16.msra.mxu0 0
        %1206 = vmatprep.subr.bf16.mxu0 0
        %1207 = vmatpush1.bf16.msra.mxu0 0
        %1208 = vmatprep.subr.bf16.mxu0 0
        %1209 = vmatpush1.bf16.msra.mxu0 0
        %1210 = vmatprep.subr.bf16.mxu0 0
        %1211 = vmatpush1.bf16.msra.mxu0 0
        %1212 = vmatprep.subr.bf16.mxu0 0
        %1213 = vmatpush1.bf16.msra.mxu0 0
        %1214 = vmatprep.subr.bf16.mxu0 0
        %1215 = vmatpush1.bf16.msra.mxu0 %v1195
        %1216 = vmatprep.subr.bf16.mxu0 0
        %1217 = vmatpush2.bf16.msra.mxu0 0
        %1218 = vmatprep.subr.bf16.mxu0 0
        %1219 = vmatpush2.bf16.msra.mxu0 0
        %1220 = vmatprep.subr.bf16.mxu0 0
        %1221 = vmatpush2.bf16.msra.mxu0 0
        %1222 = vmatprep.subr.bf16.mxu0 0
        %1223 = vmatpush2.bf16.msra.mxu0 0
        %1224 = vmatprep.subr.bf16.mxu0 0
        %1225 = vmatpush2.bf16.msra.mxu0 0
        %1226 = vmatprep.subr.bf16.mxu0 0
        %1227 = vmatpush2.bf16.msra.mxu0 0
        %1228 = vmatprep.subr.bf16.mxu0 0
        %1229 = vmatpush2.bf16.msra.mxu0 0
        %1230 = vmatprep.subr.bf16.mxu0 0
        %1231 = vmatpush2.bf16.msra.mxu0 0
        %1232 = vmatprep.mubr.bf16.mxu0 0
        %1233 = vmatmul.mubr.bf16.gmra.mxu0 %v1198
        %v1234 = vpop.f32.mrf.mxu0
        %v1235 = vadd.f32 0.0, %v1234
        %v1236 = vpop.f32.mrf.mxu0
        %v1237 = vpop.f32.mrf.mxu0
        %v1238 = vadd.f32 0.0, %v1237
        %v1239 = vpop.f32.mrf.mxu0
        %1240 = vdwg.mxu0
        %1243 = vrot.lane.b32.xlu0 %v981, 8
        %v1244 = vpop.permute.xlu0 %1243
        %1245 = vrot.lane.b32.xlu0 %v984, 8
        %v1246 = vpop.permute.xlu0 %1245
        %1251 = vrot.lane.b32.xlu0 %v1108, 16
        %v1252 = vpop.permute.xlu0 %1251
        %1253 = vrot.lane.b32.xlu0 %v1111, 16
        %v1254 = vpop.permute.xlu0 %1253
        %1259 = vrot.lane.b32.xlu0 %v1235, 24
        %v1260 = vpop.permute.xlu0 %1259
        %1261 = vrot.lane.b32.xlu0 %v1238, 24
        %v1262 = vpop.permute.xlu0 %1261
        %v1265 = vsel %vm735, %v854, %v1244
        %v1266 = vsel %vm735, %v857, %v1246
        %v1267 = vsel %vm783, %v1265, %v1252
        %v1268 = vsel %vm783, %v1266, %v1254
        %vm1269 = vcmask 195584
        %v1270 = vsel %vm1269, %v1267, %v1260
        %v1271 = vsel %vm1269, %v1268, %v1262
        %v1272 = vpack.c.bf16 %v1271, %v1270
        %v1273 = vld [vmem:[%s527] sm:$0xf]
        %v1274 = vld [vmem:[%s527 + $0x4] sm:$0xf]
        %v1275 = vld [vmem:[%s527 + $0x8] sm:$0xf]
        %v1276 = vld [vmem:[%s527 + $0xc] sm:$0xf]
        %v1277 = vlaneseq
        %v1278 = vshrl.u32 %v1277, 7
        %v1279 = vsub.s32 0, %v1278
        %v1280 = vrot.slane %v621, %v1279
        %v1285 = vunpack.c.l.b16 %v1273
        %v1286 = vunpack.c.l.b16 %v1274
        %v1287 = vunpack.c.l.b16 %v1275
        %v1288 = vunpack.c.l.b16 %v1276
        %v1289 = vpack.c.b16 %v1286, %v1285
        %v1290 = vpack.c.b16 %v1288, %v1287
        %v1294 = vsel %vm623, %v1272, 0
        %1296 = vmatprep.subr.bf16.mxu0 0
        %1297 = vmatpush1.bf16.msra.mxu0 0
        %1298 = vmatprep.subr.bf16.mxu0 0
        %1299 = vmatpush1.bf16.msra.mxu0 0
        %1300 = vmatprep.subr.bf16.mxu0 0
        %1301 = vmatpush1.bf16.msra.mxu0 0
        %1302 = vmatprep.subr.bf16.mxu0 0
        %1303 = vmatpush1.bf16.msra.mxu0 0
        %1304 = vmatprep.subr.bf16.mxu0 0
        %1305 = vmatpush1.bf16.msra.mxu0 0
        %1306 = vmatprep.subr.bf16.mxu0 0
        %1307 = vmatpush1.bf16.msra.mxu0 0
        %1308 = vmatprep.subr.bf16.mxu0 0
        %1309 = vmatpush1.bf16.msra.mxu0 %v1290
        %1310 = vmatprep.subr.bf16.mxu0 0
        %1311 = vmatpush1.bf16.msra.mxu0 %v1289
        %1312 = vmatprep.subr.bf16.mxu0 0
        %1313 = vmatpush2.bf16.msra.mxu0 0
        %1314 = vmatprep.subr.bf16.mxu0 0
        %1315 = vmatpush2.bf16.msra.mxu0 0
        %1316 = vmatprep.subr.bf16.mxu0 0
        %1317 = vmatpush2.bf16.msra.mxu0 0
        %1318 = vmatprep.subr.bf16.mxu0 0
        %1319 = vmatpush2.bf16.msra.mxu0 0
        %1320 = vmatprep.subr.bf16.mxu0 0
        %1321 = vmatpush2.bf16.msra.mxu0 0
        %1322 = vmatprep.subr.bf16.mxu0 0
        %1323 = vmatpush2.bf16.msra.mxu0 0
        %1324 = vmatprep.subr.bf16.mxu0 0
        %1325 = vmatpush2.bf16.msra.mxu0 0
        %1326 = vmatprep.subr.bf16.mxu0 0
        %1327 = vmatpush2.bf16.msra.mxu0 0
        %1328 = vmatprep.mubr.bf16.mxu0 0
        %1329 = vmatmul.mubr.bf16.gmra.mxu0 %v1294
        %v1330 = vpop.f32.mrf.mxu0
        %v1331 = vadd.f32 %v1280, %v1330
        %v1332 = vpop.f32.mrf.mxu0
        %v1333 = vpop.f32.mrf.mxu0
        %v1334 = vadd.f32 %v1280, %v1333
        %v1335 = vpop.f32.mrf.mxu0
        %1336 = vdwg.mxu0
        %v1337 = vadd.f32 %v615, %v1331
        %v1338 = vadd.f32 %v616, %v1334
        %v1339 = vsel %vm623, %v1337, 0.0
        %1340 = vadd.xlane.f32.xlu0 %v1339
        %v1341 = vpop.xlane.xlu0 %1340
        %v1342 = vsel %vm623, %v1338, 0.0
        %1343 = vadd.xlane.f32.xlu0 %v1342
        %v1344 = vpop.xlane.xlu0 %1343
        %v1345 = vmul.f32 %v1341, %v630
        %v1346 = vmul.f32 %v1344, %v630
        %v1347 = vsub.f32 %v1337, %v1345
        %v1348 = vsub.f32 %v1338, %v1346
        %v1349 = vmul.f32 %v1347, %v1347
        %v1350 = vmul.f32 %v1348, %v1348
        %v1351 = vsel %vm623, %v1349, 0.0
        %1352 = vadd.xlane.f32.xlu0 %v1351
        %v1353 = vpop.xlane.xlu0 %1352
        %v1354 = vsel %vm623, %v1350, 0.0
        %1355 = vadd.xlane.f32.xlu0 %v1354
        %v1356 = vpop.xlane.xlu0 %1355
        %v1357 = vmul.f32 %v1353, %v630
        %v1358 = vmul.f32 %v1356, %v630
        %v1359 = vadd.f32 %v1357, 1e-05
        %v1360 = vadd.f32 %v1358, 1e-05
        %v1361 = vrsqrt.pop %v1359
        %v1362 = vrsqrt.pop %v1360
        %v1363 = vmul.f32 %v1347, %v1361
        %v1364 = vmul.f32 %v1348, %v1362
        %v1365 = vlaneseq
        %v1366 = vshrl.u32 %v1365, 7
        %v1367 = vsub.s32 0, %v1366
        %v1368 = vrot.slane %v619, %v1367
        %v1369 = vmul.f32 %v1363, %v1368
        %v1370 = vmul.f32 %v1364, %v1368
        %v1371 = vlaneseq
        %v1372 = vshrl.u32 %v1371, 7
        %v1373 = vsub.s32 0, %v1372
        %v1374 = vrot.slane %v620, %v1373
        %v1375 = vadd.f32 %v1369, %v1374
        %v1376 = vadd.f32 %v1370, %v1374
        %v1377 = vpack.c.bf16 %v1376, %v1375
        %v1378 = vld [vmem:[%s532] sm:$0xf]
        %v1379 = vld [vmem:[%s532 + $0x4] sm:$0xf]
        %v1380 = vld [vmem:[%s532 + $0x8] sm:$0xf]
        %v1381 = vld [vmem:[%s532 + $0xc] sm:$0xf]
        %v1382 = vld [vmem:[%s547] sm:$0x1]
        %v1384 = vlaneseq
        %v1385 = vshrl.u32 %v1384, 7
        %v1386 = vsub.s32 0, %v1385
        %v1387 = vrot.slane %v1382, %v1386
        %v1393 = vunpack.c.l.b16 %v1378
        %v1394 = vunpack.c.l.b16 %v1379
        %v1395 = vunpack.c.l.b16 %v1380
        %v1396 = vunpack.c.l.b16 %v1381
        %v1397 = vpack.c.b16 %v1394, %v1393
        %v1398 = vpack.c.b16 %v1396, %v1395
        %v1402 = vsel %vm623, %v1377, 0
        %1404 = vmatprep.subr.bf16.mxu0 0
        %1405 = vmatpush1.bf16.msra.mxu0 0
        %1406 = vmatprep.subr.bf16.mxu0 0
        %1407 = vmatpush1.bf16.msra.mxu0 0
        %1408 = vmatprep.subr.bf16.mxu0 0
        %1409 = vmatpush1.bf16.msra.mxu0 0
        %1410 = vmatprep.subr.bf16.mxu0 0
        %1411 = vmatpush1.bf16.msra.mxu0 0
        %1412 = vmatprep.subr.bf16.mxu0 0
        %1413 = vmatpush1.bf16.msra.mxu0 0
        %1414 = vmatprep.subr.bf16.mxu0 0
        %1415 = vmatpush1.bf16.msra.mxu0 0
        %1416 = vmatprep.subr.bf16.mxu0 0
        %1417 = vmatpush1.bf16.msra.mxu0 %v1398
        %1418 = vmatprep.subr.bf16.mxu0 0
        %1419 = vmatpush1.bf16.msra.mxu0 %v1397
        %1420 = vmatprep.subr.bf16.mxu0 0
        %1421 = vmatpush2.bf16.msra.mxu0 0
        %1422 = vmatprep.subr.bf16.mxu0 0
        %1423 = vmatpush2.bf16.msra.mxu0 0
        %1424 = vmatprep.subr.bf16.mxu0 0
        %1425 = vmatpush2.bf16.msra.mxu0 0
        %1426 = vmatprep.subr.bf16.mxu0 0
        %1427 = vmatpush2.bf16.msra.mxu0 0
        %1428 = vmatprep.subr.bf16.mxu0 0
        %1429 = vmatpush2.bf16.msra.mxu0 0
        %1430 = vmatprep.subr.bf16.mxu0 0
        %1431 = vmatpush2.bf16.msra.mxu0 0
        %1432 = vmatprep.subr.bf16.mxu0 0
        %1433 = vmatpush2.bf16.msra.mxu0 0
        %1434 = vmatprep.subr.bf16.mxu0 0
        %1435 = vmatpush2.bf16.msra.mxu0 0
        %1436 = vmatprep.mubr.bf16.mxu0 0
        %1437 = vmatmul.mubr.bf16.gmra.mxu0 %v1402
        %v1438 = vpop.f32.mrf.mxu0
        %v1439 = vadd.f32 %v1387, %v1438
        %v1440 = vpop.f32.mrf.mxu0
        %v1441 = vpop.f32.mrf.mxu0
        %v1442 = vadd.f32 %v1387, %v1441
        %v1443 = vpop.f32.mrf.mxu0
        %1444 = vdwg.mxu0
        %v1445 = vmax.f32 %v1439, 0.0
        %v1446 = vmax.f32 %v1442, 0.0
        %v1447 = vpack.c.bf16 %v1446, %v1445
        %v1448 = vld [vmem:[%s537] sm:$0xf]
        %v1449 = vld [vmem:[%s537 + $0x4] sm:$0xf]
        %v1450 = vld [vmem:[%s537 + $0x8] sm:$0xf]
        %v1451 = vld [vmem:[%s537 + $0xc] sm:$0xf]
        %v1452 = vld [vmem:[%s537 + $0x10] sm:$0xf]
        %v1453 = vld [vmem:[%s537 + $0x14] sm:$0xf]
        %v1454 = vld [vmem:[%s537 + $0x18] sm:$0xf]
        %v1455 = vld [vmem:[%s537 + $0x1c] sm:$0xf]
        %v1456 = vld [vmem:[%s537 + $0x20] sm:$0xf]
        %v1457 = vld [vmem:[%s537 + $0x24] sm:$0xf]
        %v1458 = vld [vmem:[%s537 + $0x28] sm:$0xf]
        %v1459 = vld [vmem:[%s537 + $0x2c] sm:$0xf]
        %v1460 = vld [vmem:[%s537 + $0x30] sm:$0xf]
        %v1461 = vld [vmem:[%s537 + $0x34] sm:$0xf]
        %v1462 = vld [vmem:[%s537 + $0x38] sm:$0xf]
        %v1463 = vld [vmem:[%s537 + $0x3c] sm:$0xf]
        %v1464 = vlaneseq
        %v1465 = vshrl.u32 %v1464, 7
        %v1466 = vsub.s32 0, %v1465
        %v1467 = vrot.slane %v622, %v1466
        %v1484 = vunpack.c.l.b16 %v1448
        %v1485 = vunpack.c.l.b16 %v1449
        %v1486 = vunpack.c.l.b16 %v1450
        %v1487 = vunpack.c.l.b16 %v1451
        %v1488 = vunpack.c.l.b16 %v1452
        %v1489 = vunpack.c.l.b16 %v1453
        %v1490 = vunpack.c.l.b16 %v1454
        %v1491 = vunpack.c.l.b16 %v1455
        %v1492 = vunpack.c.l.b16 %v1456
        %v1493 = vunpack.c.l.b16 %v1457
        %v1494 = vunpack.c.l.b16 %v1458
        %v1495 = vunpack.c.l.b16 %v1459
        %v1496 = vunpack.c.l.b16 %v1460
        %v1497 = vunpack.c.l.b16 %v1461
        %v1498 = vunpack.c.l.b16 %v1462
        %v1499 = vunpack.c.l.b16 %v1463
        %v1500 = vpack.c.b16 %v1485, %v1484
        %v1501 = vpack.c.b16 %v1487, %v1486
        %v1502 = vpack.c.b16 %v1489, %v1488
        %v1503 = vpack.c.b16 %v1491, %v1490
        %v1504 = vpack.c.b16 %v1493, %v1492
        %v1505 = vpack.c.b16 %v1495, %v1494
        %v1506 = vpack.c.b16 %v1497, %v1496
        %v1507 = vpack.c.b16 %v1499, %v1498
        %1516 = vmatprep.subr.bf16.mxu0 0
        %1517 = vmatpush1.bf16.msra.mxu0 %v1507
        %1518 = vmatprep.subr.bf16.mxu0 0
        %1519 = vmatpush1.bf16.msra.mxu0 %v1506
        %1520 = vmatprep.subr.bf16.mxu0 0
        %1521 = vmatpush1.bf16.msra.mxu0 %v1505
        %1522 = vmatprep.subr.bf16.mxu0 0
        %1523 = vmatpush1.bf16.msra.mxu0 %v1504
        %1524 = vmatprep.subr.bf16.mxu0 0
        %1525 = vmatpush1.bf16.msra.mxu0 %v1503
        %1526 = vmatprep.subr.bf16.mxu0 0
        %1527 = vmatpush1.bf16.msra.mxu0 %v1502
        %1528 = vmatprep.subr.bf16.mxu0 0
        %1529 = vmatpush1.bf16.msra.mxu0 %v1501
        %1530 = vmatprep.subr.bf16.mxu0 0
        %1531 = vmatpush1.bf16.msra.mxu0 %v1500
        %1532 = vmatprep.subr.bf16.mxu0 0
        %1533 = vmatpush2.bf16.msra.mxu0 0
        %1534 = vmatprep.subr.bf16.mxu0 0
        %1535 = vmatpush2.bf16.msra.mxu0 0
        %1536 = vmatprep.subr.bf16.mxu0 0
        %1537 = vmatpush2.bf16.msra.mxu0 0
        %1538 = vmatprep.subr.bf16.mxu0 0
        %1539 = vmatpush2.bf16.msra.mxu0 0
        %1540 = vmatprep.subr.bf16.mxu0 0
        %1541 = vmatpush2.bf16.msra.mxu0 0
        %1542 = vmatprep.subr.bf16.mxu0 0
        %1543 = vmatpush2.bf16.msra.mxu0 0
        %1544 = vmatprep.subr.bf16.mxu0 0
        %1545 = vmatpush2.bf16.msra.mxu0 0
        %1546 = vmatprep.subr.bf16.mxu0 0
        %1547 = vmatpush2.bf16.msra.mxu0 0
        %1548 = vmatprep.mubr.bf16.mxu0 0
        %1549 = vmatmul.mubr.bf16.gmra.mxu0 %v1447
        %v1550 = vpop.f32.mrf.mxu0
        %v1551 = vadd.f32 %v1467, %v1550
        %v1552 = vpop.f32.mrf.mxu0
        %v1553 = vpop.f32.mrf.mxu0
        %v1554 = vadd.f32 %v1467, %v1553
        %v1555 = vpop.f32.mrf.mxu0
        %1556 = vdwg.mxu0
        %v1557 = vadd.f32 %v1337, %v1551
        %v1558 = vadd.f32 %v1338, %v1554
        %v1559 = vadd.f32 %v1557, %v615
        %v1560 = vadd.f32 %v1558, %v616
        %v1561 = vld [vmem:[%s2 + $0x1] sm:$0x1]
        %v1562 = vld [vmem:[%s2 + $0x2] sm:$0x1]
        %v1563 = vsel %vm623, %v1559, 0.0
        %1564 = vadd.xlane.f32.xlu0 %v1563
        %v1565 = vpop.xlane.xlu0 %1564
        %v1566 = vsel %vm623, %v1560, 0.0
        %1567 = vadd.xlane.f32.xlu0 %v1566
        %v1568 = vpop.xlane.xlu0 %1567
        %v1569 = vmul.f32 %v1565, %v630
        %v1570 = vmul.f32 %v1568, %v630
        %v1571 = vsub.f32 %v1559, %v1569
        %v1572 = vsub.f32 %v1560, %v1570
        %v1573 = vmul.f32 %v1571, %v1571
        %v1574 = vmul.f32 %v1572, %v1572
        %v1575 = vsel %vm623, %v1573, 0.0
        %1576 = vadd.xlane.f32.xlu0 %v1575
        %v1577 = vpop.xlane.xlu0 %1576
        %v1578 = vsel %vm623, %v1574, 0.0
        %1579 = vadd.xlane.f32.xlu0 %v1578
        %v1580 = vpop.xlane.xlu0 %1579
        %v1581 = vmul.f32 %v1577, %v630
        %v1582 = vmul.f32 %v1580, %v630
        %v1583 = vadd.f32 %v1581, 1e-05
        %v1584 = vadd.f32 %v1582, 1e-05
        %v1585 = vrsqrt.pop %v1583
        %v1586 = vrsqrt.pop %v1584
        %v1587 = vmul.f32 %v1571, %v1585
        %v1588 = vmul.f32 %v1572, %v1586
        %v1589 = vlaneseq
        %v1590 = vshrl.u32 %v1589, 7
        %v1591 = vsub.s32 0, %v1590
        %v1592 = vrot.slane %v1561, %v1591
        %v1593 = vmul.f32 %v1587, %v1592
        %v1594 = vmul.f32 %v1588, %v1592
        %v1595 = vlaneseq
        %v1596 = vshrl.u32 %v1595, 7
        %v1597 = vsub.s32 0, %v1596
        %v1598 = vrot.slane %v1562, %v1597
        %v1599 = vadd.f32 %v1593, %v1598
        %v1600 = vadd.f32 %v1594, %v1598
        %1601 = vst.msk [vmem:[#allocation2] sm:$0xff] %vm623, %v1599
        %1602 = vst.msk [vmem:[#allocation2 + $0x8] sm:$0xff] %vm623, %v1600
        %p1603 = scmp.eq.s32.totalorder %s31, 1
        // Predicated region
        $region73: #{tpu_custom_call.1} parent=67 // pred_check
          %p1604 = pneg %p1603
        $region74: #{tpu_custom_call.1} parent=67 // pred_check_branch
          %1606 = sbr.rel (%p1604) target = $region76
        $region75: #{tpu_custom_call.1} parent=67 // pred_region
          %v1607 = vpack.c.bf16 %v1600, %v1599
          %v1609 = vsel %vm783, 1031814528, 0
          %1611 = vmatprep.subr.bf16.mxu0 0
          %1612 = vmatpush1.bf16.msra.mxu0 0
          %1613 = vmatprep.subr.bf16.mxu0 0
          %1614 = vmatpush1.bf16.msra.mxu0 0
          %1615 = vmatprep.subr.bf16.mxu0 0
          %1616 = vmatpush1.bf16.msra.mxu0 0
          %1617 = vmatprep.subr.bf16.mxu0 0
          %1618 = vmatpush1.bf16.msra.mxu0 0
          %1619 = vmatprep.subr.bf16.mxu0 0
          %1620 = vmatpush1.bf16.msra.mxu0 0
          %1621 = vmatprep.subr.bf16.mxu0 0
          %1622 = vmatpush1.bf16.msra.mxu0 0
          %1623 = vmatprep.subr.bf16.mxu0 0
          %1624 = vmatpush1.bf16.msra.mxu0 0
          %1625 = vmatprep.subr.bf16.mxu0 0
          %1626 = vmatpush1.bf16.msra.mxu0 %v1607
          %1627 = vmatprep.subr.bf16.mxu0 0
          %1628 = vmatpush2.bf16.msra.mxu0 0
          %1629 = vmatprep.subr.bf16.mxu0 0
          %1630 = vmatpush2.bf16.msra.mxu0 0
          %1631 = vmatprep.subr.bf16.mxu0 0
          %1632 = vmatpush2.bf16.msra.mxu0 0
          %1633 = vmatprep.subr.bf16.mxu0 0
          %1634 = vmatpush2.bf16.msra.mxu0 0
          %1635 = vmatprep.subr.bf16.mxu0 0
          %1636 = vmatpush2.bf16.msra.mxu0 0
          %1637 = vmatprep.subr.bf16.mxu0 0
          %1638 = vmatpush2.bf16.msra.mxu0 0
          %1639 = vmatprep.subr.bf16.mxu0 0
          %1640 = vmatpush2.bf16.msra.mxu0 0
          %1641 = vmatprep.subr.bf16.mxu0 0
          %1642 = vmatpush2.bf16.msra.mxu0 0
          %1643 = vmatprep.mubr.bf16.mxu0 0
          %1644 = vmatmul.mubr.bf16.gmra.mxu0 %v1609
          %v1645 = vpop.f32.mrf.mxu0
          %v1646 = vadd.f32 0.0, %v1645
          %v1647 = vpop.f32.mrf.mxu0
          %v1648 = vpop.f32.mrf.mxu0
          %v1649 = vpop.f32.mrf.mxu0
          %1650 = vdwg.mxu0
          %v1651 = vpack.c.bf16 %v1646, %v1646
          %v1652 = vld [vmem:[%s3] sm:$0xf]
          %v1653 = vld [vmem:[%s3 + $0x4] sm:$0xf]
          %v1654 = vld [vmem:[%s3 + $0x8] sm:$0xf]
          %v1655 = vld [vmem:[%s3 + $0xc] sm:$0xf]
          %v1656 = vld [vmem:[%s4] sm:$0x1]
          %v1661 = vunpack.c.l.b16 %v1652
          %v1662 = vunpack.c.l.b16 %v1653
          %v1663 = vunpack.c.l.b16 %v1654
          %v1664 = vunpack.c.l.b16 %v1655
          %v1665 = vpack.c.b16 %v1662, %v1661
          %v1666 = vpack.c.b16 %v1664, %v1663
          %v1670 = vsel %vm623, %v1651, 0
          %1672 = vmatprep.subr.bf16.mxu0 0
          %1673 = vmatpush1.bf16.msra.mxu0 0
          %1674 = vmatprep.subr.bf16.mxu0 0
          %1675 = vmatpush1.bf16.msra.mxu0 0
          %1676 = vmatprep.subr.bf16.mxu0 0
          %1677 = vmatpush1.bf16.msra.mxu0 0
          %1678 = vmatprep.subr.bf16.mxu0 0
          %1679 = vmatpush1.bf16.msra.mxu0 0
          %1680 = vmatprep.subr.bf16.mxu0 0
          %1681 = vmatpush1.bf16.msra.mxu0 0
          %1682 = vmatprep.subr.bf16.mxu0 0
          %1683 = vmatpush1.bf16.msra.mxu0 0
          %1684 = vmatprep.subr.bf16.mxu0 0
          %1685 = vmatpush1.bf16.msra.mxu0 %v1666
          %1686 = vmatprep.subr.bf16.mxu0 0
          %1687 = vmatpush1.bf16.msra.mxu0 %v1665
          %1688 = vmatprep.subr.bf16.mxu0 0
          %1689 = vmatpush2.bf16.msra.mxu0 0
          %1690 = vmatprep.subr.bf16.mxu0 0
          %1691 = vmatpush2.bf16.msra.mxu0 0
          %1692 = vmatprep.subr.bf16.mxu0 0
          %1693 = vmatpush2.bf16.msra.mxu0 0
          %1694 = vmatprep.subr.bf16.mxu0 0
          %1695 = vmatpush2.bf16.msra.mxu0 0
          %1696 = vmatprep.subr.bf16.mxu0 0
          %1697 = vmatpush2.bf16.msra.mxu0 0
          %1698 = vmatprep.subr.bf16.mxu0 0
          %1699 = vmatpush2.bf16.msra.mxu0 0
          %1700 = vmatprep.subr.bf16.mxu0 0
          %1701 = vmatpush2.bf16.msra.mxu0 0
          %1702 = vmatprep.subr.bf16.mxu0 0
          %1703 = vmatpush2.bf16.msra.mxu0 0
          %1704 = vmatprep.mubr.bf16.mxu0 0
          %1705 = vmatmul.mubr.bf16.gmra.mxu0 %v1670
          %v1706 = vpop.f32.mrf.mxu0
          %v1707 = vadd.f32 %v1656, %v1706
          %v1708 = vpop.f32.mrf.mxu0
          %v1709 = vpop.f32.mrf.mxu0
          %v1710 = vpop.f32.mrf.mxu0
          %1711 = vdwg.mxu0
          %vm1712 = vcmask 8192
          %1713 = vst.msk [vmem:[%s512] sm:$0x1] %vm1712, %v1707
        $region76: #{tpu_custom_call.1} parent=67 // pred_fallthru
          _
        %s1714 = sand.u32 %s338, 1
        %s1715 = scalar_lea.sflag [#allocation4], %s1714
        %s1716 = sand.u32 %s338, 1
        %s1717 = scalar_lea.vmem [#allocation3], %s1716
        // Predicated region
        $region77: #{tpu_custom_call.1} parent=67 // pred_check
          %p1718 = pneg %p348
        $region78: #{tpu_custom_call.1} parent=67 // pred_check_branch
          %1720 = sbr.rel (%p1718) target = $region80
        $region79: #{tpu_custom_call.1} parent=67 // pred_region
          %s1722 = ssub.s32 16, 16
          %1723 = vsyncadd %s1715, %s1722
          %s1724 = smul.addr %s30, 16
          %s1725 = scalar_lea.hbm %s12, %s1724
          %s1727 = sshll.u32 %s1717, 4
          %s1728 = int_to_ptr.vmem [resolvable:$true] %s1727
          %1730 = dma.vmem_to_hbm [thread:$0]  %s1728, 16, %s1725, %s1715
        $region80: #{tpu_custom_call.1} parent=67 // pred_fallthru
          _
      $region68: #{tpu_custom_call.1} parent=5 // pred_fallthru
        _
      %p1731 = scmp.le.s32.totalorder 2, %s21
      // Predicated region
      $region81: #{tpu_custom_call.1} parent=5 // pred_check
        %p1732 = pneg %p1731
      $region82: #{tpu_custom_call.1} parent=5 // pred_check_branch
        %1734 = sbr.rel (%p1732) target = $region84
      $region83: #{tpu_custom_call.1} parent=5 // pred_region
        %s1735 = ssub.s32 %s21, 2
        // Predicated region
        $region85: #{tpu_custom_call.1} parent=83 // pred_check
          %p1736 = pneg %p354
        $region86: #{tpu_custom_call.1} parent=83 // pred_check_branch
          %1738 = sbr.rel (%p1736) target = $region88
        $region87: #{tpu_custom_call.1} parent=83 // pred_region
          %s1739 = sand.u32 %s339, 1
          %s1740 = scalar_lea.sflag [#allocation4], %s1739
          %s1741 = sand.u32 %s339, 1
          %s1742 = scalar_lea.vmem [#allocation3], %s1741
          %1743 = dma.done %s1740, 16
        $region88: #{tpu_custom_call.1} parent=83 // pred_fallthru
          _
      $region84: #{tpu_custom_call.1} parent=5 // pred_fallthru
        _
    $region6: #{tpu_custom_call.1} parent=1 // loop_footer
      %s25 = sadd.s32 1, %s21
    $region7: #{tpu_custom_call.1} parent=1 // loop_footer_branch
      %20 = sbr.rel target = $region3
    $region8: #{tpu_custom_call.1} parent=1 // loop_exit
      _
    %1744 = vsyncpa [#allocation4], 1
    %s1745 = scalar_lea.sflag [#allocation4], 1
    %1746 = vsyncpa %s1745, 1

</llo_original>
